<compile_context>
chip_gen: v5e
topology: v5e:2x2
jax: 0.10.0
libtpu: 0.0.40
codegen_flags: <defaults>
</compile_context>

<pallas_src>
import functools

import jax
import jax.numpy as jnp
from jax import lax
from jax.experimental import pallas as pl
from jax.experimental.pallas import tpu as pltpu


def get_same_padding(kernel_size, dilation):
    return int((kernel_size * dilation - dilation) / 2)


# --------------------------------------------------------------------------- #
# Fused kernel
# --------------------------------------------------------------------------- #
def _resblock_kernel(x_ref, w_ref, b_ref, o_ref, pad_ref, im2col_ref,
                     *, structure, K, T, Cp, pad_max, slope):
    """Whole ResBlock for one batch element.

    x_ref:      (1, T, Cp)        input activation (channel-padded, lane dense)
    w_ref:      (L, K*Cp, Cp)     stacked effective (weight-normed) conv weights
    b_ref:      (L, 1, Cp)        stacked biases
    o_ref:      (1, T, Cp)        output
    pad_ref:    (T + 2*pad_max, Cp) VMEM scratch for in-kernel 'same' padding
    im2col_ref: (T, K*Cp)         VMEM scratch: K dilated taps packed along lanes
    """
    cdt = pad_ref.dtype
    # Zero once per grid step; only the halo rows matter (centre is rewritten each layer).
    pad_ref[...] = jnp.zeros_like(pad_ref)

    x_cur = x_ref[0].astype(jnp.float32)                      # (T, Cp) running activation

    for inner in structure:                                   # static python loops: unrolled
        res = x_cur
        out = x_cur
        for (li, d) in inner:
            pad_d = (K * d - d) // 2
            # place current activation in the centre of the padded scratch
            pad_ref[pl.ds(pad_max, T), :] = out.astype(cdt)
            # im2col: pack the K dilated taps along lanes (128-aligned offsets)
            for k in range(K):
                start = pad_max - pad_d + k * d               # static python int
                im2col_ref[:, k * Cp:(k + 1) * Cp] = pad_ref[pl.ds(start, T), :]
            # one MXU matmul per conv layer: (T, K*Cp) x (K*Cp, Cp) -> (T, Cp)
            acc = jnp.dot(im2col_ref[...], w_ref[li],
                          preferred_element_type=jnp.float32)
            acc = acc + b_ref[li].astype(jnp.float32)         # (1, Cp) broadcast
            out = jnp.where(acc >= 0.0, acc, jnp.float32(slope) * acc)
        x_cur = out + res                                     # ResBlockInner residual

    o_ref[0] = x_cur.astype(o_ref.dtype)


def fused_resblock(x_btc, w_stack, b_stack, structure, K, slope,
                   compute_dtype=jnp.float32):
    """x_btc: (B, T, Cp) channel-padded activation; returns (B, T, Cp)."""
    B, T, Cp = x_btc.shape
    L, KCp, _ = w_stack.shape
    assert KCp == K * Cp

    dilations = [d for inner in structure for (_, d) in inner]
    pad_max = max(get_same_padding(K, d) for d in dilations)
    Tp = T + 2 * pad_max

    kernel = functools.partial(
        _resblock_kernel, structure=structure, K=K, T=T, Cp=Cp,
        pad_max=pad_max, slope=float(slope))

    return pl.pallas_call(
        kernel,
        out_shape=jax.ShapeDtypeStruct((B, T, Cp), x_btc.dtype),
        grid_spec=pltpu.PrefetchScalarGridSpec(
            num_scalar_prefetch=0,
            grid=(B,),
            in_specs=[
                pl.BlockSpec((1, T, Cp), lambda b: (b, 0, 0)),
                pl.BlockSpec((L, KCp, Cp), lambda b: (0, 0, 0)),
                pl.BlockSpec((L, 1, Cp), lambda b: (0, 0, 0)),
            ],
            out_specs=pl.BlockSpec((1, T, Cp), lambda b: (b, 0, 0)),
            scratch_shapes=[
                pltpu.VMEM((Tp, Cp), compute_dtype),      # padded activation
                pltpu.VMEM((T, K * Cp), compute_dtype),   # im2col taps
            ],
        ),
        compiler_params=pltpu.CompilerParams(
            dimension_semantics=("parallel",)),           # v7x: 2 TCs split the batch
    )(x_btc, w_stack.astype(compute_dtype), b_stack)


# --------------------------------------------------------------------------- #
# Parameter setup (done once, outside the forward pass)
# --------------------------------------------------------------------------- #
def init_resblock_params(key, hidden_channels, kernel_size, dilation_rates_2d):
    """Deterministic synthetic init. Effective weight = g * v / ||v||_(in,k)."""
    assert kernel_size % 2 == 1, "get_same_padding assumes odd kernel_size"
    C, K = hidden_channels, kernel_size
    params = []
    for dilation_rates in dilation_rates_2d:
        inner = []
        for d in dilation_rates:
            key, k1, k2, k3 = jax.random.split(key, 4)
            v = 0.1 * jax.random.normal(k1, (C, C, K), jnp.float32)   # (C_out, C_in, K)
            g = 1.0 + 0.1 * jax.random.normal(k2, (C,), jnp.float32)
            b = 0.1 * jax.random.normal(k3, (C,), jnp.float32)
            nrm = jnp.sqrt(jnp.sum(v * v, axis=(1, 2), keepdims=True))
            w_oik = (g.reshape(C, 1, 1) / nrm) * v                    # weight-norm glue
            inner.append({"w_oik": w_oik, "b": b, "dilation": int(d)})
        params.append(inner)
    return params


def pack_resblock_params(params, hidden_channels, kernel_size):
    """One-time packing: weight-norm'd weights -> stacked, channel-padded, tap-flattened."""
    C, K = hidden_channels, kernel_size
    Cp = ((C + 127) // 128) * 128        # lane-dense channel width
    w_rows, b_rows, structure = [], [], []
    li = 0
    for inner in params:
        dils = []
        for layer in inner:
            w_kic = jnp.transpose(layer["w_oik"], (2, 1, 0))          # (K, C_in, C_out)
            w_kic = jnp.pad(w_kic, ((0, 0), (0, Cp - C), (0, Cp - C)))
            w_rows.append(w_kic.reshape(K * Cp, Cp))                  # tap-major rows
            b_rows.append(jnp.pad(layer["b"], (0, Cp - C)).reshape(1, Cp))
            dils.append((li, int(layer["dilation"])))
            li += 1
        structure.append(tuple(dils))
    return {
        "w": jnp.stack(w_rows).astype(jnp.float32),    # (L, K*Cp, Cp)
        "b": jnp.stack(b_rows).astype(jnp.float32),    # (L, 1, Cp)
        "structure": tuple(structure),
        "C": C, "Cp": Cp, "K": K,
    }


def resblock_forward(packed, x_nct, slope=0.2, compute_dtype=jnp.float32):
    """ResBlock forward. x_nct: (B, C, T) like PyTorch; returns (B, C, T)."""
    C, Cp, K = packed["C"], packed["Cp"], packed["K"]
    B, C_in, T = x_nct.shape
    assert C_in == C
    x = jnp.transpose(x_nct, (0, 2, 1))                               # NCT -> BTC
    if Cp > C:
        x = jnp.pad(x, ((0, 0), (0, 0), (0, Cp - C)))                 # lane-dense channels
    out = fused_resblock(x, packed["w"], packed["b"], packed["structure"],
                         K, slope, compute_dtype=compute_dtype)
    out = out[:, :, :C]
    return jnp.transpose(out, (0, 2, 1))                              # BTC -> NCT


# --------------------------------------------------------------------------- #
# Pure-JAX reference (NCT, matches PyTorch semantics)
# --------------------------------------------------------------------------- #
def resblock_ref(params, x_nct, slope=0.2):
    x = x_nct
    for inner in params:
        out = x
        for layer in inner:
            d = layer["dilation"]
            K = layer["w_oik"].shape[-1]
            p = get_same_padding(K, d)
            y = lax.conv_general_dilated(
                out, layer["w_oik"], window_strides=(1,), padding=[(p, p)],
                rhs_dilation=(d,), dimension_numbers=("NCH", "OIH", "NCH"))
            y = y + layer["b"].reshape(1, -1, 1)
            out = jnp.where(y >= 0.0, y, slope * y)
        x = out + x
    return x


if __name__ == "__main__":
    B, C, T = 2, 32, 64
    kernel_size = 3
    dilation_rates_2d = [[1, 3], [2, 4]]
    relu_slope = 0.2

    key = jax.random.PRNGKey(0)
    kx, kp = jax.random.split(key)
    x = jax.random.normal(kx, (B, C, T), jnp.float32)                 # NCT, like PyTorch
    params = init_resblock_params(kp, C, kernel_size, dilation_rates_2d)
    packed = pack_resblock_params(params, C, kernel_size)             # one-time packing

    out = resblock_forward(packed, x, slope=relu_slope)
    out = jax.block_until_ready(out)

    ref = resblock_ref(params, x, slope=relu_slope)
    assert out.shape == x.shape
    err = float(jnp.max(jnp.abs(out - ref)))
    if err < 1e-4:
        print("KERNEL_OK")
    else:
        print("MISMATCH", err)
</pallas_src>

<mosaic_0001>
module attributes {stable_mosaic.version = 11 : i64} {
  func.func @_resblock_kernel(%arg0: i32, %arg1: memref<1x64x128xf32, #tpu.memory_space<vmem>>, %arg2: memref<4x384x128xf32, #tpu.memory_space<vmem>>, %arg3: memref<4x1x128xf32, #tpu.memory_space<vmem>>, %arg4: memref<1x64x128xf32, #tpu.memory_space<vmem>>, %arg5: memref<72x128xf32, #tpu.memory_space<vmem>>, %arg6: memref<64x384xf32, #tpu.memory_space<vmem>>) attributes {dimension_semantics = [#tpu.dimension_semantics<parallel>], iteration_bounds = array<i64: 2>, scalar_prefetch = 0 : i64, scratch_operands = 2 : i64, tpu.core_type = #tpu.core_type<tc>, window_params = [{transform_indices = @transform_0, window_bounds = array<i64: 1, 64, 128>}, {pipeline_mode = #tpu.pipeline_mode<synchronous>, transform_indices = @transform_1, window_bounds = array<i64: 4, 384, 128>}, {pipeline_mode = #tpu.pipeline_mode<synchronous>, transform_indices = @transform_2, window_bounds = array<i64: 4, 1, 128>}, {transform_indices = @transform_3, window_bounds = array<i64: 1, 64, 128>}]} {
    %cst = arith.constant 0.000000e+00 : f32
    %0 = vector.broadcast %cst : f32 to vector<72x128xf32>
    %c0 = arith.constant 0 : index
    %c0_0 = arith.constant 0 : index
    %1 = vector.load %arg5[%c0, %c0_0] : memref<72x128xf32, #tpu.memory_space<vmem>>, vector<72x128xf32>
    tpu.vector_store %arg5[%c0, %c0_0], %0 {strides = array<i32>} : memref<72x128xf32, #tpu.memory_space<vmem>>, vector<72x128xf32>,
    %c0_1 = arith.constant 0 : index
    %c0_2 = arith.constant 0 : index
    %c0_3 = arith.constant 0 : index
    %2 = vector.load %arg1[%c0_1, %c0_2, %c0_3] : memref<1x64x128xf32, #tpu.memory_space<vmem>>, vector<1x64x128xf32>
    %3 = vector.shape_cast %2 : vector<1x64x128xf32> to vector<64x128xf32>
    %c4 = arith.constant 4 : index
    %c0_4 = arith.constant 0 : index
    %4 = vector.load %arg5[%c4, %c0_4] : memref<72x128xf32, #tpu.memory_space<vmem>>, vector<64x128xf32>
    tpu.vector_store %arg5[%c4, %c0_4], %3 {strides = array<i32>} : memref<72x128xf32, #tpu.memory_space<vmem>>, vector<64x128xf32>,
    %c3 = arith.constant 3 : index
    %c0_5 = arith.constant 0 : index
    %5 = vector.load %arg5[%c3, %c0_5] : memref<72x128xf32, #tpu.memory_space<vmem>>, vector<64x128xf32>
    %c0_6 = arith.constant 0 : index
    %c0_7 = arith.constant 0 : index
    %6 = vector.load %arg6[%c0_6, %c0_7] : memref<64x384xf32, #tpu.memory_space<vmem>>, vector<64x128xf32>
    tpu.vector_store %arg6[%c0_6, %c0_7], %5 {strides = array<i32>} : memref<64x384xf32, #tpu.memory_space<vmem>>, vector<64x128xf32>,
    %c4_8 = arith.constant 4 : index
    %c0_9 = arith.constant 0 : index
    %7 = vector.load %arg5[%c4_8, %c0_9] : memref<72x128xf32, #tpu.memory_space<vmem>>, vector<64x128xf32>
    %c0_10 = arith.constant 0 : index
    %c128 = arith.constant 128 : index
    %8 = vector.load %arg6[%c0_10, %c128] : memref<64x384xf32, #tpu.memory_space<vmem>>, vector<64x128xf32>
    tpu.vector_store %arg6[%c0_10, %c128], %7 {strides = array<i32>} : memref<64x384xf32, #tpu.memory_space<vmem>>, vector<64x128xf32>,
    %c5 = arith.constant 5 : index
    %c0_11 = arith.constant 0 : index
    %9 = vector.load %arg5[%c5, %c0_11] : memref<72x128xf32, #tpu.memory_space<vmem>>, vector<64x128xf32>
    %c0_12 = arith.constant 0 : index
    %c256 = arith.constant 256 : index
    %10 = vector.load %arg6[%c0_12, %c256] : memref<64x384xf32, #tpu.memory_space<vmem>>, vector<64x128xf32>
    tpu.vector_store %arg6[%c0_12, %c256], %9 {strides = array<i32>} : memref<64x384xf32, #tpu.memory_space<vmem>>, vector<64x128xf32>,
    %c0_13 = arith.constant 0 : index
    %c0_14 = arith.constant 0 : index
    %11 = vector.load %arg6[%c0_13, %c0_14] : memref<64x384xf32, #tpu.memory_space<vmem>>, vector<64x384xf32>
    %c0_15 = arith.constant 0 : index
    %c0_16 = arith.constant 0 : index
    %c0_17 = arith.constant 0 : index
    %12 = vector.load %arg2[%c0_15, %c0_16, %c0_17] : memref<4x384x128xf32, #tpu.memory_space<vmem>>, vector<1x384x128xf32>
    %13 = vector.shape_cast %12 : vector<1x384x128xf32> to vector<384x128xf32>
    %cst_18 = arith.constant dense<0.000000e+00> : vector<64x128xf32>
    %14 = tpu.matmul %11, %13, %cst_18 {dimension_numbers = #tpu.dot_dimension_numbers<[1], [0], [0], [1], [0, 0, 1, 1], [], []>} : vector<64x384xf32>, vector<384x128xf32>, vector<64x128xf32> -> vector<64x128xf32>
    %c0_19 = arith.constant 0 : index
    %c0_20 = arith.constant 0 : index
    %c0_21 = arith.constant 0 : index
    %15 = vector.load %arg3[%c0_19, %c0_20, %c0_21] : memref<4x1x128xf32, #tpu.memory_space<vmem>>, vector<1x1x128xf32>
    %16 = vector.shape_cast %15 : vector<1x1x128xf32> to vector<1x128xf32>
    %17 = vector.broadcast %16 : vector<1x128xf32> to vector<64x128xf32>
    %18 = arith.addf %14, %17 : vector<64x128xf32>
    %cst_22 = arith.constant 0.000000e+00 : f32
    %19 = vector.broadcast %cst_22 : f32 to vector<64x128xf32>
    %20 = arith.cmpf oge, %18, %19 : vector<64x128xf32>
    %cst_23 = arith.constant 2.000000e-01 : f32
    %21 = vector.broadcast %cst_23 : f32 to vector<64x128xf32>
    %22 = arith.mulf %21, %18 : vector<64x128xf32>
    %23 = arith.select %20, %18, %22 : vector<64x128xi1>, vector<64x128xf32>
    %c4_24 = arith.constant 4 : index
    %c0_25 = arith.constant 0 : index
    %24 = vector.load %arg5[%c4_24, %c0_25] : memref<72x128xf32, #tpu.memory_space<vmem>>, vector<64x128xf32>
    tpu.vector_store %arg5[%c4_24, %c0_25], %23 {strides = array<i32>} : memref<72x128xf32, #tpu.memory_space<vmem>>, vector<64x128xf32>,
    %c1 = arith.constant 1 : index
    %c0_26 = arith.constant 0 : index
    %25 = vector.load %arg5[%c1, %c0_26] : memref<72x128xf32, #tpu.memory_space<vmem>>, vector<64x128xf32>
    %c0_27 = arith.constant 0 : index
    %c0_28 = arith.constant 0 : index
    %26 = vector.load %arg6[%c0_27, %c0_28] : memref<64x384xf32, #tpu.memory_space<vmem>>, vector<64x128xf32>
    tpu.vector_store %arg6[%c0_27, %c0_28], %25 {strides = array<i32>} : memref<64x384xf32, #tpu.memory_space<vmem>>, vector<64x128xf32>,
    %c4_29 = arith.constant 4 : index
    %c0_30 = arith.constant 0 : index
    %27 = vector.load %arg5[%c4_29, %c0_30] : memref<72x128xf32, #tpu.memory_space<vmem>>, vector<64x128xf32>
    %c0_31 = arith.constant 0 : index
    %c128_32 = arith.constant 128 : index
    %28 = vector.load %arg6[%c0_31, %c128_32] : memref<64x384xf32, #tpu.memory_space<vmem>>, vector<64x128xf32>
    tpu.vector_store %arg6[%c0_31, %c128_32], %27 {strides = array<i32>} : memref<64x384xf32, #tpu.memory_space<vmem>>, vector<64x128xf32>,
    %c7 = arith.constant 7 : index
    %c0_33 = arith.constant 0 : index
    %29 = vector.load %arg5[%c7, %c0_33] : memref<72x128xf32, #tpu.memory_space<vmem>>, vector<64x128xf32>
    %c0_34 = arith.constant 0 : index
    %c256_35 = arith.constant 256 : index
    %30 = vector.load %arg6[%c0_34, %c256_35] : memref<64x384xf32, #tpu.memory_space<vmem>>, vector<64x128xf32>
    tpu.vector_store %arg6[%c0_34, %c256_35], %29 {strides = array<i32>} : memref<64x384xf32, #tpu.memory_space<vmem>>, vector<64x128xf32>,
    %c0_36 = arith.constant 0 : index
    %c0_37 = arith.constant 0 : index
    %31 = vector.load %arg6[%c0_36, %c0_37] : memref<64x384xf32, #tpu.memory_space<vmem>>, vector<64x384xf32>
    %c1_38 = arith.constant 1 : index
    %c0_39 = arith.constant 0 : index
    %c0_40 = arith.constant 0 : index
    %32 = vector.load %arg2[%c1_38, %c0_39, %c0_40] : memref<4x384x128xf32, #tpu.memory_space<vmem>>, vector<1x384x128xf32>
    %33 = vector.shape_cast %32 : vector<1x384x128xf32> to vector<384x128xf32>
    %cst_41 = arith.constant dense<0.000000e+00> : vector<64x128xf32>
    %34 = tpu.matmul %31, %33, %cst_41 {dimension_numbers = #tpu.dot_dimension_numbers<[1], [0], [0], [1], [0, 0, 1, 1], [], []>} : vector<64x384xf32>, vector<384x128xf32>, vector<64x128xf32> -> vector<64x128xf32>
    %c1_42 = arith.constant 1 : index
    %c0_43 = arith.constant 0 : index
    %c0_44 = arith.constant 0 : index
    %35 = vector.load %arg3[%c1_42, %c0_43, %c0_44] : memref<4x1x128xf32, #tpu.memory_space<vmem>>, vector<1x1x128xf32>
    %36 = vector.shape_cast %35 : vector<1x1x128xf32> to vector<1x128xf32>
    %37 = vector.broadcast %36 : vector<1x128xf32> to vector<64x128xf32>
    %38 = arith.addf %34, %37 : vector<64x128xf32>
    %cst_45 = arith.constant 0.000000e+00 : f32
    %39 = vector.broadcast %cst_45 : f32 to vector<64x128xf32>
    %40 = arith.cmpf oge, %38, %39 : vector<64x128xf32>
    %cst_46 = arith.constant 2.000000e-01 : f32
    %41 = vector.broadcast %cst_46 : f32 to vector<64x128xf32>
    %42 = arith.mulf %41, %38 : vector<64x128xf32>
    %43 = arith.select %40, %38, %42 : vector<64x128xi1>, vector<64x128xf32>
    %44 = arith.addf %43, %3 : vector<64x128xf32>
    %c4_47 = arith.constant 4 : index
    %c0_48 = arith.constant 0 : index
    %45 = vector.load %arg5[%c4_47, %c0_48] : memref<72x128xf32, #tpu.memory_space<vmem>>, vector<64x128xf32>
    tpu.vector_store %arg5[%c4_47, %c0_48], %44 {strides = array<i32>} : memref<72x128xf32, #tpu.memory_space<vmem>>, vector<64x128xf32>,
    %c2 = arith.constant 2 : index
    %c0_49 = arith.constant 0 : index
    %46 = vector.load %arg5[%c2, %c0_49] : memref<72x128xf32, #tpu.memory_space<vmem>>, vector<64x128xf32>
    %c0_50 = arith.constant 0 : index
    %c0_51 = arith.constant 0 : index
    %47 = vector.load %arg6[%c0_50, %c0_51] : memref<64x384xf32, #tpu.memory_space<vmem>>, vector<64x128xf32>
    tpu.vector_store %arg6[%c0_50, %c0_51], %46 {strides = array<i32>} : memref<64x384xf32, #tpu.memory_space<vmem>>, vector<64x128xf32>,
    %c4_52 = arith.constant 4 : index
    %c0_53 = arith.constant 0 : index
    %48 = vector.load %arg5[%c4_52, %c0_53] : memref<72x128xf32, #tpu.memory_space<vmem>>, vector<64x128xf32>
    %c0_54 = arith.constant 0 : index
    %c128_55 = arith.constant 128 : index
    %49 = vector.load %arg6[%c0_54, %c128_55] : memref<64x384xf32, #tpu.memory_space<vmem>>, vector<64x128xf32>
    tpu.vector_store %arg6[%c0_54, %c128_55], %48 {strides = array<i32>} : memref<64x384xf32, #tpu.memory_space<vmem>>, vector<64x128xf32>,
    %c6 = arith.constant 6 : index
    %c0_56 = arith.constant 0 : index
    %50 = vector.load %arg5[%c6, %c0_56] : memref<72x128xf32, #tpu.memory_space<vmem>>, vector<64x128xf32>
    %c0_57 = arith.constant 0 : index
    %c256_58 = arith.constant 256 : index
    %51 = vector.load %arg6[%c0_57, %c256_58] : memref<64x384xf32, #tpu.memory_space<vmem>>, vector<64x128xf32>
    tpu.vector_store %arg6[%c0_57, %c256_58], %50 {strides = array<i32>} : memref<64x384xf32, #tpu.memory_space<vmem>>, vector<64x128xf32>,
    %c0_59 = arith.constant 0 : index
    %c0_60 = arith.constant 0 : index
    %52 = vector.load %arg6[%c0_59, %c0_60] : memref<64x384xf32, #tpu.memory_space<vmem>>, vector<64x384xf32>
    %c2_61 = arith.constant 2 : index
    %c0_62 = arith.constant 0 : index
    %c0_63 = arith.constant 0 : index
    %53 = vector.load %arg2[%c2_61, %c0_62, %c0_63] : memref<4x384x128xf32, #tpu.memory_space<vmem>>, vector<1x384x128xf32>
    %54 = vector.shape_cast %53 : vector<1x384x128xf32> to vector<384x128xf32>
    %cst_64 = arith.constant dense<0.000000e+00> : vector<64x128xf32>
    %55 = tpu.matmul %52, %54, %cst_64 {dimension_numbers = #tpu.dot_dimension_numbers<[1], [0], [0], [1], [0, 0, 1, 1], [], []>} : vector<64x384xf32>, vector<384x128xf32>, vector<64x128xf32> -> vector<64x128xf32>
    %c2_65 = arith.constant 2 : index
    %c0_66 = arith.constant 0 : index
    %c0_67 = arith.constant 0 : index
    %56 = vector.load %arg3[%c2_65, %c0_66, %c0_67] : memref<4x1x128xf32, #tpu.memory_space<vmem>>, vector<1x1x128xf32>
    %57 = vector.shape_cast %56 : vector<1x1x128xf32> to vector<1x128xf32>
    %58 = vector.broadcast %57 : vector<1x128xf32> to vector<64x128xf32>
    %59 = arith.addf %55, %58 : vector<64x128xf32>
    %cst_68 = arith.constant 0.000000e+00 : f32
    %60 = vector.broadcast %cst_68 : f32 to vector<64x128xf32>
    %61 = arith.cmpf oge, %59, %60 : vector<64x128xf32>
    %cst_69 = arith.constant 2.000000e-01 : f32
    %62 = vector.broadcast %cst_69 : f32 to vector<64x128xf32>
    %63 = arith.mulf %62, %59 : vector<64x128xf32>
    %64 = arith.select %61, %59, %63 : vector<64x128xi1>, vector<64x128xf32>
    %c4_70 = arith.constant 4 : index
    %c0_71 = arith.constant 0 : index
    %65 = vector.load %arg5[%c4_70, %c0_71] : memref<72x128xf32, #tpu.memory_space<vmem>>, vector<64x128xf32>
    tpu.vector_store %arg5[%c4_70, %c0_71], %64 {strides = array<i32>} : memref<72x128xf32, #tpu.memory_space<vmem>>, vector<64x128xf32>,
    %c0_72 = arith.constant 0 : index
    %c0_73 = arith.constant 0 : index
    %66 = vector.load %arg5[%c0_72, %c0_73] : memref<72x128xf32, #tpu.memory_space<vmem>>, vector<64x128xf32>
    %c0_74 = arith.constant 0 : index
    %c0_75 = arith.constant 0 : index
    %67 = vector.load %arg6[%c0_74, %c0_75] : memref<64x384xf32, #tpu.memory_space<vmem>>, vector<64x128xf32>
    tpu.vector_store %arg6[%c0_74, %c0_75], %66 {strides = array<i32>} : memref<64x384xf32, #tpu.memory_space<vmem>>, vector<64x128xf32>,
    %c4_76 = arith.constant 4 : index
    %c0_77 = arith.constant 0 : index
    %68 = vector.load %arg5[%c4_76, %c0_77] : memref<72x128xf32, #tpu.memory_space<vmem>>, vector<64x128xf32>
    %c0_78 = arith.constant 0 : index
    %c128_79 = arith.constant 128 : index
    %69 = vector.load %arg6[%c0_78, %c128_79] : memref<64x384xf32, #tpu.memory_space<vmem>>, vector<64x128xf32>
    tpu.vector_store %arg6[%c0_78, %c128_79], %68 {strides = array<i32>} : memref<64x384xf32, #tpu.memory_space<vmem>>, vector<64x128xf32>,
    %c8 = arith.constant 8 : index
    %c0_80 = arith.constant 0 : index
    %70 = vector.load %arg5[%c8, %c0_80] : memref<72x128xf32, #tpu.memory_space<vmem>>, vector<64x128xf32>
    %c0_81 = arith.constant 0 : index
    %c256_82 = arith.constant 256 : index
    %71 = vector.load %arg6[%c0_81, %c256_82] : memref<64x384xf32, #tpu.memory_space<vmem>>, vector<64x128xf32>
    tpu.vector_store %arg6[%c0_81, %c256_82], %70 {strides = array<i32>} : memref<64x384xf32, #tpu.memory_space<vmem>>, vector<64x128xf32>,
    %c0_83 = arith.constant 0 : index
    %c0_84 = arith.constant 0 : index
    %72 = vector.load %arg6[%c0_83, %c0_84] : memref<64x384xf32, #tpu.memory_space<vmem>>, vector<64x384xf32>
    %c3_85 = arith.constant 3 : index
    %c0_86 = arith.constant 0 : index
    %c0_87 = arith.constant 0 : index
    %73 = vector.load %arg2[%c3_85, %c0_86, %c0_87] : memref<4x384x128xf32, #tpu.memory_space<vmem>>, vector<1x384x128xf32>
    %74 = vector.shape_cast %73 : vector<1x384x128xf32> to vector<384x128xf32>
    %cst_88 = arith.constant dense<0.000000e+00> : vector<64x128xf32>
    %75 = tpu.matmul %72, %74, %cst_88 {dimension_numbers = #tpu.dot_dimension_numbers<[1], [0], [0], [1], [0, 0, 1, 1], [], []>} : vector<64x384xf32>, vector<384x128xf32>, vector<64x128xf32> -> vector<64x128xf32>
    %c3_89 = arith.constant 3 : index
    %c0_90 = arith.constant 0 : index
    %c0_91 = arith.constant 0 : index
    %76 = vector.load %arg3[%c3_89, %c0_90, %c0_91] : memref<4x1x128xf32, #tpu.memory_space<vmem>>, vector<1x1x128xf32>
    %77 = vector.shape_cast %76 : vector<1x1x128xf32> to vector<1x128xf32>
    %78 = vector.broadcast %77 : vector<1x128xf32> to vector<64x128xf32>
    %79 = arith.addf %75, %78 : vector<64x128xf32>
    %cst_92 = arith.constant 0.000000e+00 : f32
    %80 = vector.broadcast %cst_92 : f32 to vector<64x128xf32>
    %81 = arith.cmpf oge, %79, %80 : vector<64x128xf32>
    %cst_93 = arith.constant 2.000000e-01 : f32
    %82 = vector.broadcast %cst_93 : f32 to vector<64x128xf32>
    %83 = arith.mulf %82, %79 : vector<64x128xf32>
    %84 = arith.select %81, %79, %83 : vector<64x128xi1>, vector<64x128xf32>
    %85 = arith.addf %84, %44 : vector<64x128xf32>
    %c0_94 = arith.constant 0 : index
    %c0_95 = arith.constant 0 : index
    %c0_96 = arith.constant 0 : index
    %86 = vector.load %arg4[%c0_94, %c0_95, %c0_96] : memref<1x64x128xf32, #tpu.memory_space<vmem>>, vector<1x64x128xf32>
    %87 = vector.shape_cast %86 : vector<1x64x128xf32> to vector<64x128xf32>
    %88 = vector.shape_cast %85 : vector<64x128xf32> to vector<1x64x128xf32>
    tpu.vector_store %arg4[%c0_94, %c0_95, %c0_96], %88 {strides = array<i32>} : memref<1x64x128xf32, #tpu.memory_space<vmem>>, vector<1x64x128xf32>,
    return
  }
  func.func @transform_0(%arg0: i32) -> (i32, i32, i32) {
    %c0_i32 = arith.constant 0 : i32
    %c0_i32_0 = arith.constant 0 : i32
    %c0_i32_1 = arith.constant 0 : i32
    return %arg0, %c0_i32, %c0_i32_0 : i32, i32, i32
  }
  func.func @transform_1(%arg0: i32) -> (i32, i32, i32) {
    %c0_i32 = arith.constant 0 : i32
    %c0_i32_0 = arith.constant 0 : i32
    %c0_i32_1 = arith.constant 0 : i32
    %c0_i32_2 = arith.constant 0 : i32
    return %c0_i32, %c0_i32_0, %c0_i32_1 : i32, i32, i32
  }
  func.func @transform_2(%arg0: i32) -> (i32, i32, i32) {
    %c0_i32 = arith.constant 0 : i32
    %c0_i32_0 = arith.constant 0 : i32
    %c0_i32_1 = arith.constant 0 : i32
    %c0_i32_2 = arith.constant 0 : i32
    return %c0_i32, %c0_i32_0, %c0_i32_1 : i32, i32, i32
  }
  func.func @transform_3(%arg0: i32) -> (i32, i32, i32) {
    %c0_i32 = arith.constant 0 : i32
    %c0_i32_0 = arith.constant 0 : i32
    %c0_i32_1 = arith.constant 0 : i32
    return %arg0, %c0_i32, %c0_i32_0 : i32, i32, i32
  }
}

</mosaic_0001>

<llo_original>
// kernel: tpu_custom_call.1
$region0: #{tpu_custom_call.1}
  #allocation0 [shape = 'u32[]', space=smem, size = 0x4, offset = 0x4, fixed_abs, tag = 'smem constant byte address 0x4 - core index']
  #allocation1 [shape = 'u32[72,128]{1,0:T(1,128)}', space=vmem, size = 0x9000, scoped, tag = 'internal scratch']
  #allocation2 [shape = 'f32[72,128]{1,0:T(8,128)}', space=vmem, size = 0x9000, scoped, tag = 'scratch operand']
  #allocation3 [shape = 'f32[64,384]{1,0:T(8,128)}', space=vmem, size = 0x18000, scoped, tag = 'scratch operand']
  %s0 = inlined_call_operand.hbm [shape: f32[2,64,128], index: 0, kind: input, shape index: {}]
  %s1 = inlined_call_operand.hbm [shape: f32[4,384,128], index: 1, kind: input, shape index: {}]
  %s2 = inlined_call_operand.hbm [shape: f32[4,1,128], index: 2, kind: input, shape index: {}]
  %s3 = inlined_call_operand.hbm [shape: f32[2,64,128], index: 3, kind: output, shape index: {}]
  %s4 = sld [smem:[#allocation0]]
  $region57: #{tpu_custom_call.1} parent=0
    _
  %s6 = ssub.s32 1, %s4
  %s7 = scalar_select 0, %s6, %s4
  $region1: #{tpu_custom_call.1} parent=0
    #allocation4 [shape = 'u8[65536]{0}', space=vmem, size = 0x10000, scoped, tag = 'input window, operand 0']
    #allocation5 [shape = 's32[2]{0}', space=sflag, size = 0x8, scoped, tag = 'scoped memory for tpu_custom_call.1']
    #allocation6 [shape = 's32[2]{0}', space=sflag, size = 0x8, scoped, tag = 'scoped memory for tpu_custom_call.1']
    #allocation7 [shape = 'u8[786432]{0}', space=vmem, size = 0xc0000, scoped, tag = 'input window, operand 1, single buffered']
    #allocation8 [shape = 's32[1]{0}', space=sflag, size = 0x4, scoped, tag = 'scoped memory for tpu_custom_call.1']
    #allocation9 [shape = 'u8[2048]{0}', space=vmem, size = 0x800, scoped, tag = 'input window, operand 2, single buffered']
    #allocation10 [shape = 'u8[65536]{0}', space=vmem, size = 0x10000, scoped, tag = 'output window, operand 0']
    %8 = vsyncpa [#allocation5], 0
    %s9 = scalar_lea.sflag [#allocation5], 1
    %10 = vsyncpa %s9, 0
    %11 = vsyncpa [#allocation8], 0
    %12 = vsyncpa [#allocation6], 0
    %s13 = scalar_lea.sflag [#allocation6], 1
    %14 = vsyncpa %s13, 0
    loop: start=0, step=1, limit=4
    $region2: #{tpu_custom_call.1} parent=1 // loop_pre_header
      _
    $region3: #{tpu_custom_call.1} parent=1 // loop_header
      %s16 = sphi 0, %s20
      %p17 = scmp.ge.s32.totalorder %s16, 4
      %s26 = sphi 0, %s28
      %s29 = sphi 0, %s26
      %s30 = sphi 0, %s29
      %s46 = sphi 0, %s30
      %s50 = sphi 0, %s50
      %s52 = sphi 0, %s50
      %s53 = sphi 0, %s52
      %s67 = sphi 0, %s53
      %s71 = sphi 0, %s71
      %s73 = sphi 0, %s71
      %s74 = sphi 0, %s73
      %s88 = sphi 0, %s74
      %s94 = sphi 0, %s96
      %s97 = sphi 0, %s94
      %s98 = sphi 0, %s97
      %s114 = sphi 0, %s98
    $region4: #{tpu_custom_call.1} parent=1 // loop_header_branch
      %19 = sbr.rel (%p17) target = $region8
    $region5: #{tpu_custom_call.1} parent=1 // loop_body
      %s21 = ssub.s32 %s16, 1
      %s22 = ssub.s32 %s16, 2
      %s23 = sadd.s32 %s16, 1
      %s24 = ssub.s32 %s16, %s23
      %p25 = scmp.eq.s32.totalorder %s24, 0
      %s27 = sadd.s32 %s26, 1
      %s28 = scalar_select %p25, %s26, %s27
      %p31 = pneg %p25
      %p32 = scmp.eq.s32.totalorder %s16, 1
      %p33 = por %p31, %p32
      %p34 = scmp.ne.s32.totalorder %s26, %s29
      %p35 = scmp.eq.s32.totalorder %s16, 0
      %p36 = por %p34, %p35
      %p37 = scmp.ne.s32.totalorder %s26, %s29
      %p38 = scmp.eq.s32.totalorder %s21, 1
      %p39 = por %p37, %p38
      %p40 = scmp.ne.s32.totalorder %s29, %s30
      %p41 = scmp.eq.s32.totalorder %s21, 0
      %p42 = por %p40, %p41
      %p43 = scmp.ne.s32.totalorder %s29, %s30
      %p44 = scmp.eq.s32.totalorder %s22, 1
      %p45 = por %p43, %p44
      %p47 = scmp.ne.s32.totalorder %s30, %s46
      %p48 = scmp.eq.s32.totalorder %s22, 0
      %p49 = por %p47, %p48
      %s51 = sadd.s32 %s50, 1
      %p54 = scmp.eq.s32.totalorder %s16, 1
      %p55 = scmp.ne.s32.totalorder %s50, %s52
      %p56 = scmp.eq.s32.totalorder %s16, 0
      %p57 = por %p55, %p56
      %p58 = scmp.ne.s32.totalorder %s50, %s52
      %p59 = scmp.eq.s32.totalorder %s21, 1
      %p60 = por %p58, %p59
      %p61 = scmp.ne.s32.totalorder %s52, %s53
      %p62 = scmp.eq.s32.totalorder %s21, 0
      %p63 = por %p61, %p62
      %p64 = scmp.ne.s32.totalorder %s52, %s53
      %p65 = scmp.eq.s32.totalorder %s22, 1
      %p66 = por %p64, %p65
      %p68 = scmp.ne.s32.totalorder %s53, %s67
      %p69 = scmp.eq.s32.totalorder %s22, 0
      %p70 = por %p68, %p69
      %s72 = sadd.s32 %s71, 1
      %p75 = scmp.eq.s32.totalorder %s16, 1
      %p76 = scmp.ne.s32.totalorder %s71, %s73
      %p77 = scmp.eq.s32.totalorder %s16, 0
      %p78 = por %p76, %p77
      %p79 = scmp.ne.s32.totalorder %s71, %s73
      %p80 = scmp.eq.s32.totalorder %s21, 1
      %p81 = por %p79, %p80
      %p82 = scmp.ne.s32.totalorder %s73, %s74
      %p83 = scmp.eq.s32.totalorder %s21, 0
      %p84 = por %p82, %p83
      %p85 = scmp.ne.s32.totalorder %s73, %s74
      %p86 = scmp.eq.s32.totalorder %s22, 1
      %p87 = por %p85, %p86
      %p89 = scmp.ne.s32.totalorder %s74, %s88
      %p90 = scmp.eq.s32.totalorder %s22, 0
      %p91 = por %p89, %p90
      %s92 = ssub.s32 %s16, %s23
      %p93 = scmp.eq.s32.totalorder %s92, 0
      %s95 = sadd.s32 %s94, 1
      %s96 = scalar_select %p93, %s94, %s95
      %p99 = pneg %p93
      %p100 = scmp.eq.s32.totalorder %s16, 1
      %p101 = por %p99, %p100
      %p102 = scmp.ne.s32.totalorder %s94, %s97
      %p103 = scmp.eq.s32.totalorder %s16, 0
      %p104 = por %p102, %p103
      %p105 = scmp.ne.s32.totalorder %s94, %s97
      %p106 = scmp.eq.s32.totalorder %s21, 1
      %p107 = por %p105, %p106
      %p108 = scmp.ne.s32.totalorder %s97, %s98
      %p109 = scmp.eq.s32.totalorder %s21, 0
      %p110 = por %p108, %p109
      %p111 = scmp.ne.s32.totalorder %s97, %s98
      %p112 = scmp.eq.s32.totalorder %s22, 1
      %p113 = por %p111, %p112
      %p115 = scmp.ne.s32.totalorder %s98, %s114
      %p116 = scmp.eq.s32.totalorder %s22, 0
      %p117 = por %p115, %p116
      %p118 = scmp.le.s32.totalorder 1, %s16
      %p119 = scmp.lt.s32.totalorder %s16, 3
      %p120 = pnand %p118, %p119
      %p121 = pneg %p120
      // Predicated region
      $region9: #{tpu_custom_call.1} parent=5 // pred_check
        _
      $region10: #{tpu_custom_call.1} parent=5 // pred_check_branch
        %123 = sbr.rel (%p120) target = $region12
      $region11: #{tpu_custom_call.1} parent=5 // pred_region
        %s124 = ssub.s32 %s16, 1
        // Predicated region
        $region13: #{tpu_custom_call.1} parent=11 // pred_check
          %p125 = pneg %p63
        $region14: #{tpu_custom_call.1} parent=11 // pred_check_branch
          %127 = sbr.rel (%p125) target = $region16
        $region15: #{tpu_custom_call.1} parent=11 // pred_region
          %129 = vsyncadd [#allocation8], 0
          %s130 = sshll.u32 %s1, 4
          %s131 = int_to_ptr.hbm [resolvable:$true] %s130
          %s132 = sshll.u32 [#allocation7], 4
          %s133 = int_to_ptr.vmem [resolvable:$true] %s132
          %138 = dma.hbm_to_vmem [thread:$0]  %s131, 24576, %s133, [#allocation8], 128, 128, 8
        $region16: #{tpu_custom_call.1} parent=11 // pred_fallthru
          _
        // Predicated region
        $region17: #{tpu_custom_call.1} parent=11 // pred_check
          %p139 = pneg %p84
        $region18: #{tpu_custom_call.1} parent=11 // pred_check_branch
          %141 = sbr.rel (%p139) target = $region20
        $region19: #{tpu_custom_call.1} parent=11 // pred_region
          %143 = vsyncadd [#allocation8], 0
          %s144 = sshll.u32 %s2, 4
          %s145 = int_to_ptr.hbm [resolvable:$true] %s144
          %s146 = sshll.u32 [#allocation9], 4
          %s147 = int_to_ptr.vmem [resolvable:$true] %s146
          %152 = dma.hbm_to_vmem [thread:$0]  %s145, 64, %s147, [#allocation8], 16, 16, 1
        $region20: #{tpu_custom_call.1} parent=11 // pred_fallthru
          _
      $region12: #{tpu_custom_call.1} parent=5 // pred_fallthru
        _
      %p153 = scmp.lt.s32.totalorder %s16, 2
      // Predicated region
      $region21: #{tpu_custom_call.1} parent=5 // pred_check
        %p154 = pneg %p153
      $region22: #{tpu_custom_call.1} parent=5 // pred_check_branch
        %156 = sbr.rel (%p154) target = $region24
      $region23: #{tpu_custom_call.1} parent=5 // pred_region
        // Predicated region
        $region25: #{tpu_custom_call.1} parent=23 // pred_check
          %p157 = pneg %p36
        $region26: #{tpu_custom_call.1} parent=23 // pred_check_branch
          %159 = sbr.rel (%p157) target = $region28
        $region27: #{tpu_custom_call.1} parent=23 // pred_region
          %s160 = sand.u32 %s26, 1
          %s161 = scalar_lea.sflag [#allocation5], %s160
          %s162 = sand.u32 %s26, 1
          %s163 = smul.addr %s162, 64
          %s164 = scalar_lea.vmem [#allocation4], %s163
          %166 = vsyncadd %s161, 0
          %s167 = smul.addr %s16, 8
          %s168 = smul.addr %s167, 8
          %s169 = scalar_lea.hbm %s0, %s168
          %s170 = sshll.u32 %s169, 4
          %s171 = int_to_ptr.hbm [resolvable:$true] %s170
          %s172 = sshll.u32 %s164, 4
          %s173 = int_to_ptr.vmem [resolvable:$true] %s172
          %178 = dma.hbm_to_vmem [thread:$0]  %s171, 1024, %s173, %s161, 128, 128, 8
        $region28: #{tpu_custom_call.1} parent=23 // pred_fallthru
          _
      $region24: #{tpu_custom_call.1} parent=5 // pred_fallthru
        _
      %p179 = scmp.le.s32.totalorder 1, %s16
      %p180 = scmp.lt.s32.totalorder %s16, 3
      %p181 = pnand %p179, %p180
      %p182 = pneg %p181
      // Predicated region
      $region29: #{tpu_custom_call.1} parent=5 // pred_check
        _
      $region30: #{tpu_custom_call.1} parent=5 // pred_check_branch
        %184 = sbr.rel (%p181) target = $region32
      $region31: #{tpu_custom_call.1} parent=5 // pred_region
        %s185 = ssub.s32 %s16, 1
        %s186 = sand.u32 %s29, 1
        %s187 = scalar_lea.sflag [#allocation5], %s186
        %s188 = sand.u32 %s29, 1
        %s189 = smul.addr %s188, 64
        %s190 = scalar_lea.vmem [#allocation4], %s189
        // Predicated region
        $region33: #{tpu_custom_call.1} parent=31 // pred_check
          %p191 = pneg %p42
        $region34: #{tpu_custom_call.1} parent=31 // pred_check_branch
          %193 = sbr.rel (%p191) target = $region36
        $region35: #{tpu_custom_call.1} parent=31 // pred_region
          %195 = dma.done %s187, 1024
        $region36: #{tpu_custom_call.1} parent=31 // pred_fallthru
          _
        // Predicated region
        $region37: #{tpu_custom_call.1} parent=31 // pred_check
          %p196 = pneg %p63
        $region38: #{tpu_custom_call.1} parent=31 // pred_check_branch
          %198 = sbr.rel (%p196) target = $region40
        $region39: #{tpu_custom_call.1} parent=31 // pred_region
          %200 = dma.done [#allocation8], 24576
        $region40: #{tpu_custom_call.1} parent=31 // pred_fallthru
          _
        // Predicated region
        $region41: #{tpu_custom_call.1} parent=31 // pred_check
          %p201 = pneg %p84
        $region42: #{tpu_custom_call.1} parent=31 // pred_check_branch
          %203 = sbr.rel (%p201) target = $region44
        $region43: #{tpu_custom_call.1} parent=31 // pred_region
          %205 = dma.done [#allocation8], 64
        $region44: #{tpu_custom_call.1} parent=31 // pred_fallthru
          _
        %s206 = sand.u32 %s29, 1
        %s207 = scalar_lea.sflag [#allocation5], %s206
        %s208 = sand.u32 %s29, 1
        %s209 = smul.addr %s208, 64
        %s210 = scalar_lea.vmem [#allocation4], %s209
        %p211 = pneg %p42
        %p212 = pneg %p39
        %p213 = pneg %p63
        %p214 = pneg %p60
        %p215 = pneg %p84
        %p216 = pneg %p81
        %p217 = pneg %p110
        %p218 = pneg %p107
        %s219 = sand.u32 %s97, 1
        %s220 = scalar_lea.sflag [#allocation6], %s219
        %s221 = sand.u32 %s97, 1
        %s222 = smul.addr %s221, 64
        %s223 = scalar_lea.vmem [#allocation10], %s222
        %224 = vst [vmem:[#allocation2] sm:$0xff] 0.0
        %225 = vst [vmem:[#allocation2 + $0x8] sm:$0xff] 0.0
        %226 = vst [vmem:[#allocation2 + $0x10] sm:$0xff] 0.0
        %227 = vst [vmem:[#allocation2 + $0x18] sm:$0xff] 0.0
        %228 = vst [vmem:[#allocation2 + $0x20] sm:$0xff] 0.0
        %229 = vst [vmem:[#allocation2 + $0x28] sm:$0xff] 0.0
        %230 = vst [vmem:[#allocation2 + $0x30] sm:$0xff] 0.0
        %231 = vst [vmem:[#allocation2 + $0x38] sm:$0xff] 0.0
        %232 = vst [vmem:[#allocation2 + $0x40] sm:$0xff] 0.0
        %v233 = vld [vmem:[%s190] sm:$0xff]
        %v234 = vld [vmem:[%s190 + $0x8] sm:$0xff]
        %v235 = vld [vmem:[%s190 + $0x10] sm:$0xff]
        %v236 = vld [vmem:[%s190 + $0x18] sm:$0xff]
        %v237 = vld [vmem:[%s190 + $0x20] sm:$0xff]
        %v238 = vld [vmem:[%s190 + $0x28] sm:$0xff]
        %v239 = vld [vmem:[%s190 + $0x30] sm:$0xff]
        %v240 = vld [vmem:[%s190 + $0x38] sm:$0xff]
        %241 = vst [vmem:[#allocation2 + $0x4] sm:$0xff] %v233
        %242 = vst [vmem:[#allocation2 + $0xc] sm:$0xff] %v234
        %243 = vst [vmem:[#allocation2 + $0x14] sm:$0xff] %v235
        %244 = vst [vmem:[#allocation2 + $0x1c] sm:$0xff] %v236
        %245 = vst [vmem:[#allocation2 + $0x24] sm:$0xff] %v237
        %246 = vst [vmem:[#allocation2 + $0x2c] sm:$0xff] %v238
        %247 = vst [vmem:[#allocation2 + $0x34] sm:$0xff] %v239
        %248 = vst [vmem:[#allocation2 + $0x3c] sm:$0xff] %v240
        %v249 = vld [vmem:[#allocation2 + $0x3] sm:$0xff]
        %v250 = vld [vmem:[#allocation2 + $0xb] sm:$0xff]
        %v251 = vld [vmem:[#allocation2 + $0x13] sm:$0xff]
        %v252 = vld [vmem:[#allocation2 + $0x1b] sm:$0xff]
        %v253 = vld [vmem:[#allocation2 + $0x23] sm:$0xff]
        %v254 = vld [vmem:[#allocation2 + $0x2b] sm:$0xff]
        %v255 = vld [vmem:[#allocation2 + $0x33] sm:$0xff]
        %v256 = vld [vmem:[#allocation2 + $0x3b] sm:$0xff]
        %257 = vst [vmem:[#allocation3] sm:$0xff] %v249
        %258 = vst [vmem:[#allocation3 + $0x18] sm:$0xff] %v250
        %259 = vst [vmem:[#allocation3 + $0x30] sm:$0xff] %v251
        %260 = vst [vmem:[#allocation3 + $0x48] sm:$0xff] %v252
        %261 = vst [vmem:[#allocation3 + $0x60] sm:$0xff] %v253
        %262 = vst [vmem:[#allocation3 + $0x78] sm:$0xff] %v254
        %263 = vst [vmem:[#allocation3 + $0x90] sm:$0xff] %v255
        %264 = vst [vmem:[#allocation3 + $0xa8] sm:$0xff] %v256
        %v265 = vld [vmem:[#allocation2 + $0x4] sm:$0xff]
        %v266 = vld [vmem:[#allocation2 + $0xc] sm:$0xff]
        %v267 = vld [vmem:[#allocation2 + $0x14] sm:$0xff]
        %v268 = vld [vmem:[#allocation2 + $0x1c] sm:$0xff]
        %v269 = vld [vmem:[#allocation2 + $0x24] sm:$0xff]
        %v270 = vld [vmem:[#allocation2 + $0x2c] sm:$0xff]
        %v271 = vld [vmem:[#allocation2 + $0x34] sm:$0xff]
        %v272 = vld [vmem:[#allocation2 + $0x3c] sm:$0xff]
        %273 = vst [vmem:[#allocation3 + $0x8] sm:$0xff] %v265
        %274 = vst [vmem:[#allocation3 + $0x20] sm:$0xff] %v266
        %275 = vst [vmem:[#allocation3 + $0x38] sm:$0xff] %v267
        %276 = vst [vmem:[#allocation3 + $0x50] sm:$0xff] %v268
        %277 = vst [vmem:[#allocation3 + $0x68] sm:$0xff] %v269
        %278 = vst [vmem:[#allocation3 + $0x80] sm:$0xff] %v270
        %279 = vst [vmem:[#allocation3 + $0x98] sm:$0xff] %v271
        %280 = vst [vmem:[#allocation3 + $0xb0] sm:$0xff] %v272
        %v281 = vld [vmem:[#allocation2 + $0x5] sm:$0xff]
        %v282 = vld [vmem:[#allocation2 + $0xd] sm:$0xff]
        %v283 = vld [vmem:[#allocation2 + $0x15] sm:$0xff]
        %v284 = vld [vmem:[#allocation2 + $0x1d] sm:$0xff]
        %v285 = vld [vmem:[#allocation2 + $0x25] sm:$0xff]
        %v286 = vld [vmem:[#allocation2 + $0x2d] sm:$0xff]
        %v287 = vld [vmem:[#allocation2 + $0x35] sm:$0xff]
        %v288 = vld [vmem:[#allocation2 + $0x3d] sm:$0xff]
        %289 = vst [vmem:[#allocation3 + $0x10] sm:$0xff] %v281
        %290 = vst [vmem:[#allocation3 + $0x28] sm:$0xff] %v282
        %291 = vst [vmem:[#allocation3 + $0x40] sm:$0xff] %v283
        %292 = vst [vmem:[#allocation3 + $0x58] sm:$0xff] %v284
        %293 = vst [vmem:[#allocation3 + $0x70] sm:$0xff] %v285
        %294 = vst [vmem:[#allocation3 + $0x88] sm:$0xff] %v286
        %295 = vst [vmem:[#allocation3 + $0xa0] sm:$0xff] %v287
        %296 = vst [vmem:[#allocation3 + $0xb8] sm:$0xff] %v288
        %v297 = vld [vmem:[#allocation3] sm:$0xff]
        %v298 = vld [vmem:[#allocation3 + $0x8] sm:$0xff]
        %v299 = vld [vmem:[#allocation3 + $0x10] sm:$0xff]
        %v300 = vld [vmem:[#allocation3 + $0x18] sm:$0xff]
        %v301 = vld [vmem:[#allocation3 + $0x20] sm:$0xff]
        %v302 = vld [vmem:[#allocation3 + $0x28] sm:$0xff]
        %v303 = vld [vmem:[#allocation3 + $0x30] sm:$0xff]
        %v304 = vld [vmem:[#allocation3 + $0x38] sm:$0xff]
        %v305 = vld [vmem:[#allocation3 + $0x40] sm:$0xff]
        %v306 = vld [vmem:[#allocation3 + $0x48] sm:$0xff]
        %v307 = vld [vmem:[#allocation3 + $0x50] sm:$0xff]
        %v308 = vld [vmem:[#allocation3 + $0x58] sm:$0xff]
        %v309 = vld [vmem:[#allocation3 + $0x60] sm:$0xff]
        %v310 = vld [vmem:[#allocation3 + $0x68] sm:$0xff]
        %v311 = vld [vmem:[#allocation3 + $0x70] sm:$0xff]
        %v312 = vld [vmem:[#allocation3 + $0x78] sm:$0xff]
        %v313 = vld [vmem:[#allocation3 + $0x80] sm:$0xff]
        %v314 = vld [vmem:[#allocation3 + $0x88] sm:$0xff]
        %v315 = vld [vmem:[#allocation3 + $0x90] sm:$0xff]
        %v316 = vld [vmem:[#allocation3 + $0x98] sm:$0xff]
        %v317 = vld [vmem:[#allocation3 + $0xa0] sm:$0xff]
        %v318 = vld [vmem:[#allocation3 + $0xa8] sm:$0xff]
        %v319 = vld [vmem:[#allocation3 + $0xb0] sm:$0xff]
        %v320 = vld [vmem:[#allocation3 + $0xb8] sm:$0xff]
        %v321 = vld [vmem:[#allocation7] sm:$0xff]
        %v322 = vld [vmem:[#allocation7 + $0x8] sm:$0xff]
        %v323 = vld [vmem:[#allocation7 + $0x10] sm:$0xff]
        %v324 = vld [vmem:[#allocation7 + $0x18] sm:$0xff]
        %v325 = vld [vmem:[#allocation7 + $0x20] sm:$0xff]
        %v326 = vld [vmem:[#allocation7 + $0x28] sm:$0xff]
        %v327 = vld [vmem:[#allocation7 + $0x30] sm:$0xff]
        %v328 = vld [vmem:[#allocation7 + $0x38] sm:$0xff]
        %v329 = vld [vmem:[#allocation7 + $0x40] sm:$0xff]
        %v330 = vld [vmem:[#allocation7 + $0x48] sm:$0xff]
        %v331 = vld [vmem:[#allocation7 + $0x50] sm:$0xff]
        %v332 = vld [vmem:[#allocation7 + $0x58] sm:$0xff]
        %v333 = vld [vmem:[#allocation7 + $0x60] sm:$0xff]
        %v334 = vld [vmem:[#allocation7 + $0x68] sm:$0xff]
        %v335 = vld [vmem:[#allocation7 + $0x70] sm:$0xff]
        %v336 = vld [vmem:[#allocation7 + $0x78] sm:$0xff]
        %v337 = vld [vmem:[#allocation7 + $0x80] sm:$0xff]
        %v338 = vld [vmem:[#allocation7 + $0x88] sm:$0xff]
        %v339 = vld [vmem:[#allocation7 + $0x90] sm:$0xff]
        %v340 = vld [vmem:[#allocation7 + $0x98] sm:$0xff]
        %v341 = vld [vmem:[#allocation7 + $0xa0] sm:$0xff]
        %v342 = vld [vmem:[#allocation7 + $0xa8] sm:$0xff]
        %v343 = vld [vmem:[#allocation7 + $0xb0] sm:$0xff]
        %v344 = vld [vmem:[#allocation7 + $0xb8] sm:$0xff]
        %v345 = vld [vmem:[#allocation7 + $0xc0] sm:$0xff]
        %v346 = vld [vmem:[#allocation7 + $0xc8] sm:$0xff]
        %v347 = vld [vmem:[#allocation7 + $0xd0] sm:$0xff]
        %v348 = vld [vmem:[#allocation7 + $0xd8] sm:$0xff]
        %v349 = vld [vmem:[#allocation7 + $0xe0] sm:$0xff]
        %v350 = vld [vmem:[#allocation7 + $0xe8] sm:$0xff]
        %v351 = vld [vmem:[#allocation7 + $0xf0] sm:$0xff]
        %v352 = vld [vmem:[#allocation7 + $0xf8] sm:$0xff]
        %v353 = vld [vmem:[#allocation7 + $0x100] sm:$0xff]
        %v354 = vld [vmem:[#allocation7 + $0x108] sm:$0xff]
        %v355 = vld [vmem:[#allocation7 + $0x110] sm:$0xff]
        %v356 = vld [vmem:[#allocation7 + $0x118] sm:$0xff]
        %v357 = vld [vmem:[#allocation7 + $0x120] sm:$0xff]
        %v358 = vld [vmem:[#allocation7 + $0x128] sm:$0xff]
        %v359 = vld [vmem:[#allocation7 + $0x130] sm:$0xff]
        %v360 = vld [vmem:[#allocation7 + $0x138] sm:$0xff]
        %v361 = vld [vmem:[#allocation7 + $0x140] sm:$0xff]
        %v362 = vld [vmem:[#allocation7 + $0x148] sm:$0xff]
        %v363 = vld [vmem:[#allocation7 + $0x150] sm:$0xff]
        %v364 = vld [vmem:[#allocation7 + $0x158] sm:$0xff]
        %v365 = vld [vmem:[#allocation7 + $0x160] sm:$0xff]
        %v366 = vld [vmem:[#allocation7 + $0x168] sm:$0xff]
        %v367 = vld [vmem:[#allocation7 + $0x170] sm:$0xff]
        %v368 = vld [vmem:[#allocation7 + $0x178] sm:$0xff]
        %v369 = vld [vmem:[#allocation9] sm:$0x1]
        %v371 = vperm.slane %v369, 0
        %373 = vmatpush.msra.mxu0 %v336
        %374 = vmatpush.msra.mxu0 %v335
        %375 = vmatpush.msra.mxu0 %v334
        %376 = vmatpush.msra.mxu0 %v333
        %377 = vmatpush.msra.mxu0 %v332
        %378 = vmatpush.msra.mxu0 %v331
        %379 = vmatpush.msra.mxu0 %v330
        %380 = vmatpush.msra.mxu0 %v329
        %381 = vmatpush.msra.mxu0 %v328
        %382 = vmatpush.msra.mxu0 %v327
        %383 = vmatpush.msra.mxu0 %v326
        %384 = vmatpush.msra.mxu0 %v325
        %385 = vmatpush.msra.mxu0 %v324
        %386 = vmatpush.msra.mxu0 %v323
        %387 = vmatpush.msra.mxu0 %v322
        %388 = vmatpush.msra.mxu0 %v321
        %389 = vmatmul.f32.gmra.mxu0 %v297
        %v390 = vpop.f32.mrf.mxu0
        %v391 = vadd.f32 %v371, %v390
        %392 = vmatmul.f32.gmra.mxu0 %v300
        %v393 = vpop.f32.mrf.mxu0
        %v394 = vadd.f32 %v371, %v393
        %395 = vmatmul.f32.gmra.mxu0 %v303
        %v396 = vpop.f32.mrf.mxu0
        %v397 = vadd.f32 %v371, %v396
        %398 = vmatmul.f32.gmra.mxu0 %v306
        %v399 = vpop.f32.mrf.mxu0
        %v400 = vadd.f32 %v371, %v399
        %401 = vmatmul.f32.gmra.mxu0 %v309
        %v402 = vpop.f32.mrf.mxu0
        %v403 = vadd.f32 %v371, %v402
        %404 = vmatmul.f32.gmra.mxu0 %v312
        %v405 = vpop.f32.mrf.mxu0
        %v406 = vadd.f32 %v371, %v405
        %407 = vmatmul.f32.gmra.mxu0 %v315
        %v408 = vpop.f32.mrf.mxu0
        %v409 = vadd.f32 %v371, %v408
        %410 = vmatmul.f32.gmra.mxu0 %v318
        %v411 = vpop.f32.mrf.mxu0
        %v412 = vadd.f32 %v371, %v411
        %413 = vdwg.mxu0
        %414 = vmatpush.msra.mxu0 %v352
        %415 = vmatpush.msra.mxu0 %v351
        %416 = vmatpush.msra.mxu0 %v350
        %417 = vmatpush.msra.mxu0 %v349
        %418 = vmatpush.msra.mxu0 %v348
        %419 = vmatpush.msra.mxu0 %v347
        %420 = vmatpush.msra.mxu0 %v346
        %421 = vmatpush.msra.mxu0 %v345
        %422 = vmatpush.msra.mxu0 %v344
        %423 = vmatpush.msra.mxu0 %v343
        %424 = vmatpush.msra.mxu0 %v342
        %425 = vmatpush.msra.mxu0 %v341
        %426 = vmatpush.msra.mxu0 %v340
        %427 = vmatpush.msra.mxu0 %v339
        %428 = vmatpush.msra.mxu0 %v338
        %429 = vmatpush.msra.mxu0 %v337
        %430 = vmatmul.f32.gmra.mxu0 %v298
        %v431 = vpop.f32.mrf.mxu0
        %v432 = vadd.f32 %v391, %v431
        %433 = vmatmul.f32.gmra.mxu0 %v301
        %v434 = vpop.f32.mrf.mxu0
        %v435 = vadd.f32 %v394, %v434
        %436 = vmatmul.f32.gmra.mxu0 %v304
        %v437 = vpop.f32.mrf.mxu0
        %v438 = vadd.f32 %v397, %v437
        %439 = vmatmul.f32.gmra.mxu0 %v307
        %v440 = vpop.f32.mrf.mxu0
        %v441 = vadd.f32 %v400, %v440
        %442 = vmatmul.f32.gmra.mxu0 %v310
        %v443 = vpop.f32.mrf.mxu0
        %v444 = vadd.f32 %v403, %v443
        %445 = vmatmul.f32.gmra.mxu0 %v313
        %v446 = vpop.f32.mrf.mxu0
        %v447 = vadd.f32 %v406, %v446
        %448 = vmatmul.f32.gmra.mxu0 %v316
        %v449 = vpop.f32.mrf.mxu0
        %v450 = vadd.f32 %v409, %v449
        %451 = vmatmul.f32.gmra.mxu0 %v319
        %v452 = vpop.f32.mrf.mxu0
        %v453 = vadd.f32 %v412, %v452
        %454 = vdwg.mxu0
        %455 = vmatpush.msra.mxu0 %v368
        %456 = vmatpush.msra.mxu0 %v367
        %457 = vmatpush.msra.mxu0 %v366
        %458 = vmatpush.msra.mxu0 %v365
        %459 = vmatpush.msra.mxu0 %v364
        %460 = vmatpush.msra.mxu0 %v363
        %461 = vmatpush.msra.mxu0 %v362
        %462 = vmatpush.msra.mxu0 %v361
        %463 = vmatpush.msra.mxu0 %v360
        %464 = vmatpush.msra.mxu0 %v359
        %465 = vmatpush.msra.mxu0 %v358
        %466 = vmatpush.msra.mxu0 %v357
        %467 = vmatpush.msra.mxu0 %v356
        %468 = vmatpush.msra.mxu0 %v355
        %469 = vmatpush.msra.mxu0 %v354
        %470 = vmatpush.msra.mxu0 %v353
        %471 = vmatmul.f32.gmra.mxu0 %v299
        %v472 = vpop.f32.mrf.mxu0
        %v473 = vadd.f32 %v432, %v472
        %474 = vmatmul.f32.gmra.mxu0 %v302
        %v475 = vpop.f32.mrf.mxu0
        %v476 = vadd.f32 %v435, %v475
        %477 = vmatmul.f32.gmra.mxu0 %v305
        %v478 = vpop.f32.mrf.mxu0
        %v479 = vadd.f32 %v438, %v478
        %480 = vmatmul.f32.gmra.mxu0 %v308
        %v481 = vpop.f32.mrf.mxu0
        %v482 = vadd.f32 %v441, %v481
        %483 = vmatmul.f32.gmra.mxu0 %v311
        %v484 = vpop.f32.mrf.mxu0
        %v485 = vadd.f32 %v444, %v484
        %486 = vmatmul.f32.gmra.mxu0 %v314
        %v487 = vpop.f32.mrf.mxu0
        %v488 = vadd.f32 %v447, %v487
        %489 = vmatmul.f32.gmra.mxu0 %v317
        %v490 = vpop.f32.mrf.mxu0
        %v491 = vadd.f32 %v450, %v490
        %492 = vmatmul.f32.gmra.mxu0 %v320
        %v493 = vpop.f32.mrf.mxu0
        %v494 = vadd.f32 %v453, %v493
        %495 = vdwg.mxu0
        %vm496 = vcmp.ge.f32.partialorder %v473, 0.0
        %vm497 = vcmp.ge.f32.partialorder %v476, 0.0
        %vm498 = vcmp.ge.f32.partialorder %v479, 0.0
        %vm499 = vcmp.ge.f32.partialorder %v482, 0.0
        %vm500 = vcmp.ge.f32.partialorder %v485, 0.0
        %vm501 = vcmp.ge.f32.partialorder %v488, 0.0
        %vm502 = vcmp.ge.f32.partialorder %v491, 0.0
        %vm503 = vcmp.ge.f32.partialorder %v494, 0.0
        %v504 = vmul.f32 %v473, 0.2
        %v505 = vmul.f32 %v476, 0.2
        %v506 = vmul.f32 %v479, 0.2
        %v507 = vmul.f32 %v482, 0.2
        %v508 = vmul.f32 %v485, 0.2
        %v509 = vmul.f32 %v488, 0.2
        %v510 = vmul.f32 %v491, 0.2
        %v511 = vmul.f32 %v494, 0.2
        %v512 = vsel %vm496, %v473, %v504
        %v513 = vsel %vm497, %v476, %v505
        %v514 = vsel %vm498, %v479, %v506
        %v515 = vsel %vm499, %v482, %v507
        %v516 = vsel %vm500, %v485, %v508
        %v517 = vsel %vm501, %v488, %v509
        %v518 = vsel %vm502, %v491, %v510
        %v519 = vsel %vm503, %v494, %v511
        %520 = vst [vmem:[#allocation2 + $0x4] sm:$0xff] %v512
        %521 = vst [vmem:[#allocation2 + $0xc] sm:$0xff] %v513
        %522 = vst [vmem:[#allocation2 + $0x14] sm:$0xff] %v514
        %523 = vst [vmem:[#allocation2 + $0x1c] sm:$0xff] %v515
        %524 = vst [vmem:[#allocation2 + $0x24] sm:$0xff] %v516
        %525 = vst [vmem:[#allocation2 + $0x2c] sm:$0xff] %v517
        %526 = vst [vmem:[#allocation2 + $0x34] sm:$0xff] %v518
        %527 = vst [vmem:[#allocation2 + $0x3c] sm:$0xff] %v519
        %v528 = vld [vmem:[#allocation2 + $0x1] sm:$0xff]
        %v529 = vld [vmem:[#allocation2 + $0x9] sm:$0xff]
        %v530 = vld [vmem:[#allocation2 + $0x11] sm:$0xff]
        %v531 = vld [vmem:[#allocation2 + $0x19] sm:$0xff]
        %v532 = vld [vmem:[#allocation2 + $0x21] sm:$0xff]
        %v533 = vld [vmem:[#allocation2 + $0x29] sm:$0xff]
        %v534 = vld [vmem:[#allocation2 + $0x31] sm:$0xff]
        %v535 = vld [vmem:[#allocation2 + $0x39] sm:$0xff]
        %536 = vst [vmem:[#allocation3] sm:$0xff] %v528
        %537 = vst [vmem:[#allocation3 + $0x18] sm:$0xff] %v529
        %538 = vst [vmem:[#allocation3 + $0x30] sm:$0xff] %v530
        %539 = vst [vmem:[#allocation3 + $0x48] sm:$0xff] %v531
        %540 = vst [vmem:[#allocation3 + $0x60] sm:$0xff] %v532
        %541 = vst [vmem:[#allocation3 + $0x78] sm:$0xff] %v533
        %542 = vst [vmem:[#allocation3 + $0x90] sm:$0xff] %v534
        %543 = vst [vmem:[#allocation3 + $0xa8] sm:$0xff] %v535
        %v544 = vld [vmem:[#allocation2 + $0x4] sm:$0xff]
        %v545 = vld [vmem:[#allocation2 + $0xc] sm:$0xff]
        %v546 = vld [vmem:[#allocation2 + $0x14] sm:$0xff]
        %v547 = vld [vmem:[#allocation2 + $0x1c] sm:$0xff]
        %v548 = vld [vmem:[#allocation2 + $0x24] sm:$0xff]
        %v549 = vld [vmem:[#allocation2 + $0x2c] sm:$0xff]
        %v550 = vld [vmem:[#allocation2 + $0x34] sm:$0xff]
        %v551 = vld [vmem:[#allocation2 + $0x3c] sm:$0xff]
        %552 = vst [vmem:[#allocation3 + $0x8] sm:$0xff] %v544
        %553 = vst [vmem:[#allocation3 + $0x20] sm:$0xff] %v545
        %554 = vst [vmem:[#allocation3 + $0x38] sm:$0xff] %v546
        %555 = vst [vmem:[#allocation3 + $0x50] sm:$0xff] %v547
        %556 = vst [vmem:[#allocation3 + $0x68] sm:$0xff] %v548
        %557 = vst [vmem:[#allocation3 + $0x80] sm:$0xff] %v549
        %558 = vst [vmem:[#allocation3 + $0x98] sm:$0xff] %v550
        %559 = vst [vmem:[#allocation3 + $0xb0] sm:$0xff] %v551
        %v560 = vld [vmem:[#allocation2 + $0x7] sm:$0xff]
        %v561 = vld [vmem:[#allocation2 + $0xf] sm:$0xff]
        %v562 = vld [vmem:[#allocation2 + $0x17] sm:$0xff]
        %v563 = vld [vmem:[#allocation2 + $0x1f] sm:$0xff]
        %v564 = vld [vmem:[#allocation2 + $0x27] sm:$0xff]
        %v565 = vld [vmem:[#allocation2 + $0x2f] sm:$0xff]
        %v566 = vld [vmem:[#allocation2 + $0x37] sm:$0xff]
        %v567 = vld [vmem:[#allocation2 + $0x3f] sm:$0xff]
        %568 = vst [vmem:[#allocation3 + $0x10] sm:$0xff] %v560
        %569 = vst [vmem:[#allocation3 + $0x28] sm:$0xff] %v561
        %570 = vst [vmem:[#allocation3 + $0x40] sm:$0xff] %v562
        %571 = vst [vmem:[#allocation3 + $0x58] sm:$0xff] %v563
        %572 = vst [vmem:[#allocation3 + $0x70] sm:$0xff] %v564
        %573 = vst [vmem:[#allocation3 + $0x88] sm:$0xff] %v565
        %574 = vst [vmem:[#allocation3 + $0xa0] sm:$0xff] %v566
        %575 = vst [vmem:[#allocation3 + $0xb8] sm:$0xff] %v567
        %v576 = vld [vmem:[#allocation3] sm:$0xff]
        %v577 = vld [vmem:[#allocation3 + $0x8] sm:$0xff]
        %v578 = vld [vmem:[#allocation3 + $0x10] sm:$0xff]
        %v579 = vld [vmem:[#allocation3 + $0x18] sm:$0xff]
        %v580 = vld [vmem:[#allocation3 + $0x20] sm:$0xff]
        %v581 = vld [vmem:[#allocation3 + $0x28] sm:$0xff]
        %v582 = vld [vmem:[#allocation3 + $0x30] sm:$0xff]
        %v583 = vld [vmem:[#allocation3 + $0x38] sm:$0xff]
        %v584 = vld [vmem:[#allocation3 + $0x40] sm:$0xff]
        %v585 = vld [vmem:[#allocation3 + $0x48] sm:$0xff]
        %v586 = vld [vmem:[#allocation3 + $0x50] sm:$0xff]
        %v587 = vld [vmem:[#allocation3 + $0x58] sm:$0xff]
        %v588 = vld [vmem:[#allocation3 + $0x60] sm:$0xff]
        %v589 = vld [vmem:[#allocation3 + $0x68] sm:$0xff]
        %v590 = vld [vmem:[#allocation3 + $0x70] sm:$0xff]
        %v591 = vld [vmem:[#allocation3 + $0x78] sm:$0xff]
        %v592 = vld [vmem:[#allocation3 + $0x80] sm:$0xff]
        %v593 = vld [vmem:[#allocation3 + $0x88] sm:$0xff]
        %v594 = vld [vmem:[#allocation3 + $0x90] sm:$0xff]
        %v595 = vld [vmem:[#allocation3 + $0x98] sm:$0xff]
        %v596 = vld [vmem:[#allocation3 + $0xa0] sm:$0xff]
        %v597 = vld [vmem:[#allocation3 + $0xa8] sm:$0xff]
        %v598 = vld [vmem:[#allocation3 + $0xb0] sm:$0xff]
        %v599 = vld [vmem:[#allocation3 + $0xb8] sm:$0xff]
        %s600 = scalar_lea.vmem [#allocation7], 384
        %v601 = vld [vmem:[%s600] sm:$0xff]
        %v602 = vld [vmem:[%s600 + $0x8] sm:$0xff]
        %v603 = vld [vmem:[%s600 + $0x10] sm:$0xff]
        %v604 = vld [vmem:[%s600 + $0x18] sm:$0xff]
        %v605 = vld [vmem:[%s600 + $0x20] sm:$0xff]
        %v606 = vld [vmem:[%s600 + $0x28] sm:$0xff]
        %v607 = vld [vmem:[%s600 + $0x30] sm:$0xff]
        %v608 = vld [vmem:[%s600 + $0x38] sm:$0xff]
        %v609 = vld [vmem:[%s600 + $0x40] sm:$0xff]
        %v610 = vld [vmem:[%s600 + $0x48] sm:$0xff]
        %v611 = vld [vmem:[%s600 + $0x50] sm:$0xff]
        %v612 = vld [vmem:[%s600 + $0x58] sm:$0xff]
        %v613 = vld [vmem:[%s600 + $0x60] sm:$0xff]
        %v614 = vld [vmem:[%s600 + $0x68] sm:$0xff]
        %v615 = vld [vmem:[%s600 + $0x70] sm:$0xff]
        %v616 = vld [vmem:[%s600 + $0x78] sm:$0xff]
        %v617 = vld [vmem:[%s600 + $0x80] sm:$0xff]
        %v618 = vld [vmem:[%s600 + $0x88] sm:$0xff]
        %v619 = vld [vmem:[%s600 + $0x90] sm:$0xff]
        %v620 = vld [vmem:[%s600 + $0x98] sm:$0xff]
        %v621 = vld [vmem:[%s600 + $0xa0] sm:$0xff]
        %v622 = vld [vmem:[%s600 + $0xa8] sm:$0xff]
        %v623 = vld [vmem:[%s600 + $0xb0] sm:$0xff]
        %v624 = vld [vmem:[%s600 + $0xb8] sm:$0xff]
        %v625 = vld [vmem:[%s600 + $0xc0] sm:$0xff]
        %v626 = vld [vmem:[%s600 + $0xc8] sm:$0xff]
        %v627 = vld [vmem:[%s600 + $0xd0] sm:$0xff]
        %v628 = vld [vmem:[%s600 + $0xd8] sm:$0xff]
        %v629 = vld [vmem:[%s600 + $0xe0] sm:$0xff]
        %v630 = vld [vmem:[%s600 + $0xe8] sm:$0xff]
        %v631 = vld [vmem:[%s600 + $0xf0] sm:$0xff]
        %v632 = vld [vmem:[%s600 + $0xf8] sm:$0xff]
        %v633 = vld [vmem:[%s600 + $0x100] sm:$0xff]
        %v634 = vld [vmem:[%s600 + $0x108] sm:$0xff]
        %v635 = vld [vmem:[%s600 + $0x110] sm:$0xff]
        %v636 = vld [vmem:[%s600 + $0x118] sm:$0xff]
        %v637 = vld [vmem:[%s600 + $0x120] sm:$0xff]
        %v638 = vld [vmem:[%s600 + $0x128] sm:$0xff]
        %v639 = vld [vmem:[%s600 + $0x130] sm:$0xff]
        %v640 = vld [vmem:[%s600 + $0x138] sm:$0xff]
        %v641 = vld [vmem:[%s600 + $0x140] sm:$0xff]
        %v642 = vld [vmem:[%s600 + $0x148] sm:$0xff]
        %v643 = vld [vmem:[%s600 + $0x150] sm:$0xff]
        %v644 = vld [vmem:[%s600 + $0x158] sm:$0xff]
        %v645 = vld [vmem:[%s600 + $0x160] sm:$0xff]
        %v646 = vld [vmem:[%s600 + $0x168] sm:$0xff]
        %v647 = vld [vmem:[%s600 + $0x170] sm:$0xff]
        %v648 = vld [vmem:[%s600 + $0x178] sm:$0xff]
        %s649 = scalar_lea.vmem [#allocation9], 1
        %v650 = vld [vmem:[%s649] sm:$0x1]
        %v652 = vperm.slane %v650, 0
        %654 = vmatpush.msra.mxu0 %v616
        %655 = vmatpush.msra.mxu0 %v615
        %656 = vmatpush.msra.mxu0 %v614
        %657 = vmatpush.msra.mxu0 %v613
        %658 = vmatpush.msra.mxu0 %v612
        %659 = vmatpush.msra.mxu0 %v611
        %660 = vmatpush.msra.mxu0 %v610
        %661 = vmatpush.msra.mxu0 %v609
        %662 = vmatpush.msra.mxu0 %v608
        %663 = vmatpush.msra.mxu0 %v607
        %664 = vmatpush.msra.mxu0 %v606
        %665 = vmatpush.msra.mxu0 %v605
        %666 = vmatpush.msra.mxu0 %v604
        %667 = vmatpush.msra.mxu0 %v603
        %668 = vmatpush.msra.mxu0 %v602
        %669 = vmatpush.msra.mxu0 %v601
        %670 = vmatmul.f32.gmra.mxu0 %v576
        %v671 = vpop.f32.mrf.mxu0
        %v672 = vadd.f32 %v652, %v671
        %673 = vmatmul.f32.gmra.mxu0 %v579
        %v674 = vpop.f32.mrf.mxu0
        %v675 = vadd.f32 %v652, %v674
        %676 = vmatmul.f32.gmra.mxu0 %v582
        %v677 = vpop.f32.mrf.mxu0
        %v678 = vadd.f32 %v652, %v677
        %679 = vmatmul.f32.gmra.mxu0 %v585
        %v680 = vpop.f32.mrf.mxu0
        %v681 = vadd.f32 %v652, %v680
        %682 = vmatmul.f32.gmra.mxu0 %v588
        %v683 = vpop.f32.mrf.mxu0
        %v684 = vadd.f32 %v652, %v683
        %685 = vmatmul.f32.gmra.mxu0 %v591
        %v686 = vpop.f32.mrf.mxu0
        %v687 = vadd.f32 %v652, %v686
        %688 = vmatmul.f32.gmra.mxu0 %v594
        %v689 = vpop.f32.mrf.mxu0
        %v690 = vadd.f32 %v652, %v689
        %691 = vmatmul.f32.gmra.mxu0 %v597
        %v692 = vpop.f32.mrf.mxu0
        %v693 = vadd.f32 %v652, %v692
        %694 = vdwg.mxu0
        %695 = vmatpush.msra.mxu0 %v632
        %696 = vmatpush.msra.mxu0 %v631
        %697 = vmatpush.msra.mxu0 %v630
        %698 = vmatpush.msra.mxu0 %v629
        %699 = vmatpush.msra.mxu0 %v628
        %700 = vmatpush.msra.mxu0 %v627
        %701 = vmatpush.msra.mxu0 %v626
        %702 = vmatpush.msra.mxu0 %v625
        %703 = vmatpush.msra.mxu0 %v624
        %704 = vmatpush.msra.mxu0 %v623
        %705 = vmatpush.msra.mxu0 %v622
        %706 = vmatpush.msra.mxu0 %v621
        %707 = vmatpush.msra.mxu0 %v620
        %708 = vmatpush.msra.mxu0 %v619
        %709 = vmatpush.msra.mxu0 %v618
        %710 = vmatpush.msra.mxu0 %v617
        %711 = vmatmul.f32.gmra.mxu0 %v577
        %v712 = vpop.f32.mrf.mxu0
        %v713 = vadd.f32 %v672, %v712
        %714 = vmatmul.f32.gmra.mxu0 %v580
        %v715 = vpop.f32.mrf.mxu0
        %v716 = vadd.f32 %v675, %v715
        %717 = vmatmul.f32.gmra.mxu0 %v583
        %v718 = vpop.f32.mrf.mxu0
        %v719 = vadd.f32 %v678, %v718
        %720 = vmatmul.f32.gmra.mxu0 %v586
        %v721 = vpop.f32.mrf.mxu0
        %v722 = vadd.f32 %v681, %v721
        %723 = vmatmul.f32.gmra.mxu0 %v589
        %v724 = vpop.f32.mrf.mxu0
        %v725 = vadd.f32 %v684, %v724
        %726 = vmatmul.f32.gmra.mxu0 %v592
        %v727 = vpop.f32.mrf.mxu0
        %v728 = vadd.f32 %v687, %v727
        %729 = vmatmul.f32.gmra.mxu0 %v595
        %v730 = vpop.f32.mrf.mxu0
        %v731 = vadd.f32 %v690, %v730
        %732 = vmatmul.f32.gmra.mxu0 %v598
        %v733 = vpop.f32.mrf.mxu0
        %v734 = vadd.f32 %v693, %v733
        %735 = vdwg.mxu0
        %736 = vmatpush.msra.mxu0 %v648
        %737 = vmatpush.msra.mxu0 %v647
        %738 = vmatpush.msra.mxu0 %v646
        %739 = vmatpush.msra.mxu0 %v645
        %740 = vmatpush.msra.mxu0 %v644
        %741 = vmatpush.msra.mxu0 %v643
        %742 = vmatpush.msra.mxu0 %v642
        %743 = vmatpush.msra.mxu0 %v641
        %744 = vmatpush.msra.mxu0 %v640
        %745 = vmatpush.msra.mxu0 %v639
        %746 = vmatpush.msra.mxu0 %v638
        %747 = vmatpush.msra.mxu0 %v637
        %748 = vmatpush.msra.mxu0 %v636
        %749 = vmatpush.msra.mxu0 %v635
        %750 = vmatpush.msra.mxu0 %v634
        %751 = vmatpush.msra.mxu0 %v633
        %752 = vmatmul.f32.gmra.mxu0 %v578
        %v753 = vpop.f32.mrf.mxu0
        %v754 = vadd.f32 %v713, %v753
        %755 = vmatmul.f32.gmra.mxu0 %v581
        %v756 = vpop.f32.mrf.mxu0
        %v757 = vadd.f32 %v716, %v756
        %758 = vmatmul.f32.gmra.mxu0 %v584
        %v759 = vpop.f32.mrf.mxu0
        %v760 = vadd.f32 %v719, %v759
        %761 = vmatmul.f32.gmra.mxu0 %v587
        %v762 = vpop.f32.mrf.mxu0
        %v763 = vadd.f32 %v722, %v762
        %764 = vmatmul.f32.gmra.mxu0 %v590
        %v765 = vpop.f32.mrf.mxu0
        %v766 = vadd.f32 %v725, %v765
        %767 = vmatmul.f32.gmra.mxu0 %v593
        %v768 = vpop.f32.mrf.mxu0
        %v769 = vadd.f32 %v728, %v768
        %770 = vmatmul.f32.gmra.mxu0 %v596
        %v771 = vpop.f32.mrf.mxu0
        %v772 = vadd.f32 %v731, %v771
        %773 = vmatmul.f32.gmra.mxu0 %v599
        %v774 = vpop.f32.mrf.mxu0
        %v775 = vadd.f32 %v734, %v774
        %776 = vdwg.mxu0
        %vm777 = vcmp.ge.f32.partialorder %v754, 0.0
        %vm778 = vcmp.ge.f32.partialorder %v757, 0.0
        %vm779 = vcmp.ge.f32.partialorder %v760, 0.0
        %vm780 = vcmp.ge.f32.partialorder %v763, 0.0
        %vm781 = vcmp.ge.f32.partialorder %v766, 0.0
        %vm782 = vcmp.ge.f32.partialorder %v769, 0.0
        %vm783 = vcmp.ge.f32.partialorder %v772, 0.0
        %vm784 = vcmp.ge.f32.partialorder %v775, 0.0
        %v785 = vmul.f32 %v754, 0.2
        %v786 = vmul.f32 %v757, 0.2
        %v787 = vmul.f32 %v760, 0.2
        %v788 = vmul.f32 %v763, 0.2
        %v789 = vmul.f32 %v766, 0.2
        %v790 = vmul.f32 %v769, 0.2
        %v791 = vmul.f32 %v772, 0.2
        %v792 = vmul.f32 %v775, 0.2
        %v793 = vsel %vm777, %v754, %v785
        %v794 = vsel %vm778, %v757, %v786
        %v795 = vsel %vm779, %v760, %v787
        %v796 = vsel %vm780, %v763, %v788
        %v797 = vsel %vm781, %v766, %v789
        %v798 = vsel %vm782, %v769, %v790
        %v799 = vsel %vm783, %v772, %v791
        %v800 = vsel %vm784, %v775, %v792
        %v801 = vadd.f32 %v793, %v233
        %v802 = vadd.f32 %v794, %v234
        %v803 = vadd.f32 %v795, %v235
        %v804 = vadd.f32 %v796, %v236
        %v805 = vadd.f32 %v797, %v237
        %v806 = vadd.f32 %v798, %v238
        %v807 = vadd.f32 %v799, %v239
        %v808 = vadd.f32 %v800, %v240
        %809 = vst [vmem:[#allocation2 + $0x4] sm:$0xff] %v801
        %810 = vst [vmem:[#allocation2 + $0xc] sm:$0xff] %v802
        %811 = vst [vmem:[#allocation2 + $0x14] sm:$0xff] %v803
        %812 = vst [vmem:[#allocation2 + $0x1c] sm:$0xff] %v804
        %813 = vst [vmem:[#allocation2 + $0x24] sm:$0xff] %v805
        %814 = vst [vmem:[#allocation2 + $0x2c] sm:$0xff] %v806
        %815 = vst [vmem:[#allocation2 + $0x34] sm:$0xff] %v807
        %816 = vst [vmem:[#allocation2 + $0x3c] sm:$0xff] %v808
        %v817 = vld [vmem:[#allocation2 + $0x2] sm:$0xff]
        %v818 = vld [vmem:[#allocation2 + $0xa] sm:$0xff]
        %v819 = vld [vmem:[#allocation2 + $0x12] sm:$0xff]
        %v820 = vld [vmem:[#allocation2 + $0x1a] sm:$0xff]
        %v821 = vld [vmem:[#allocation2 + $0x22] sm:$0xff]
        %v822 = vld [vmem:[#allocation2 + $0x2a] sm:$0xff]
        %v823 = vld [vmem:[#allocation2 + $0x32] sm:$0xff]
        %v824 = vld [vmem:[#allocation2 + $0x3a] sm:$0xff]
        %825 = vst [vmem:[#allocation3] sm:$0xff] %v817
        %826 = vst [vmem:[#allocation3 + $0x18] sm:$0xff] %v818
        %827 = vst [vmem:[#allocation3 + $0x30] sm:$0xff] %v819
        %828 = vst [vmem:[#allocation3 + $0x48] sm:$0xff] %v820
        %829 = vst [vmem:[#allocation3 + $0x60] sm:$0xff] %v821
        %830 = vst [vmem:[#allocation3 + $0x78] sm:$0xff] %v822
        %831 = vst [vmem:[#allocation3 + $0x90] sm:$0xff] %v823
        %832 = vst [vmem:[#allocation3 + $0xa8] sm:$0xff] %v824
        %v833 = vld [vmem:[#allocation2 + $0x4] sm:$0xff]
        %v834 = vld [vmem:[#allocation2 + $0xc] sm:$0xff]
        %v835 = vld [vmem:[#allocation2 + $0x14] sm:$0xff]
        %v836 = vld [vmem:[#allocation2 + $0x1c] sm:$0xff]
        %v837 = vld [vmem:[#allocation2 + $0x24] sm:$0xff]
        %v838 = vld [vmem:[#allocation2 + $0x2c] sm:$0xff]
        %v839 = vld [vmem:[#allocation2 + $0x34] sm:$0xff]
        %v840 = vld [vmem:[#allocation2 + $0x3c] sm:$0xff]
        %841 = vst [vmem:[#allocation3 + $0x8] sm:$0xff] %v833
        %842 = vst [vmem:[#allocation3 + $0x20] sm:$0xff] %v834
        %843 = vst [vmem:[#allocation3 + $0x38] sm:$0xff] %v835
        %844 = vst [vmem:[#allocation3 + $0x50] sm:$0xff] %v836
        %845 = vst [vmem:[#allocation3 + $0x68] sm:$0xff] %v837
        %846 = vst [vmem:[#allocation3 + $0x80] sm:$0xff] %v838
        %847 = vst [vmem:[#allocation3 + $0x98] sm:$0xff] %v839
        %848 = vst [vmem:[#allocation3 + $0xb0] sm:$0xff] %v840
        %v849 = vld [vmem:[#allocation2 + $0x6] sm:$0xff]
        %v850 = vld [vmem:[#allocation2 + $0xe] sm:$0xff]
        %v851 = vld [vmem:[#allocation2 + $0x16] sm:$0xff]
        %v852 = vld [vmem:[#allocation2 + $0x1e] sm:$0xff]
        %v853 = vld [vmem:[#allocation2 + $0x26] sm:$0xff]
        %v854 = vld [vmem:[#allocation2 + $0x2e] sm:$0xff]
        %v855 = vld [vmem:[#allocation2 + $0x36] sm:$0xff]
        %v856 = vld [vmem:[#allocation2 + $0x3e] sm:$0xff]
        %857 = vst [vmem:[#allocation3 + $0x10] sm:$0xff] %v849
        %858 = vst [vmem:[#allocation3 + $0x28] sm:$0xff] %v850
        %859 = vst [vmem:[#allocation3 + $0x40] sm:$0xff] %v851
        %860 = vst [vmem:[#allocation3 + $0x58] sm:$0xff] %v852
        %861 = vst [vmem:[#allocation3 + $0x70] sm:$0xff] %v853
        %862 = vst [vmem:[#allocation3 + $0x88] sm:$0xff] %v854
        %863 = vst [vmem:[#allocation3 + $0xa0] sm:$0xff] %v855
        %864 = vst [vmem:[#allocation3 + $0xb8] sm:$0xff] %v856
        %v865 = vld [vmem:[#allocation3] sm:$0xff]
        %v866 = vld [vmem:[#allocation3 + $0x8] sm:$0xff]
        %v867 = vld [vmem:[#allocation3 + $0x10] sm:$0xff]
        %v868 = vld [vmem:[#allocation3 + $0x18] sm:$0xff]
        %v869 = vld [vmem:[#allocation3 + $0x20] sm:$0xff]
        %v870 = vld [vmem:[#allocation3 + $0x28] sm:$0xff]
        %v871 = vld [vmem:[#allocation3 + $0x30] sm:$0xff]
        %v872 = vld [vmem:[#allocation3 + $0x38] sm:$0xff]
        %v873 = vld [vmem:[#allocation3 + $0x40] sm:$0xff]
        %v874 = vld [vmem:[#allocation3 + $0x48] sm:$0xff]
        %v875 = vld [vmem:[#allocation3 + $0x50] sm:$0xff]
        %v876 = vld [vmem:[#allocation3 + $0x58] sm:$0xff]
        %v877 = vld [vmem:[#allocation3 + $0x60] sm:$0xff]
        %v878 = vld [vmem:[#allocation3 + $0x68] sm:$0xff]
        %v879 = vld [vmem:[#allocation3 + $0x70] sm:$0xff]
        %v880 = vld [vmem:[#allocation3 + $0x78] sm:$0xff]
        %v881 = vld [vmem:[#allocation3 + $0x80] sm:$0xff]
        %v882 = vld [vmem:[#allocation3 + $0x88] sm:$0xff]
        %v883 = vld [vmem:[#allocation3 + $0x90] sm:$0xff]
        %v884 = vld [vmem:[#allocation3 + $0x98] sm:$0xff]
        %v885 = vld [vmem:[#allocation3 + $0xa0] sm:$0xff]
        %v886 = vld [vmem:[#allocation3 + $0xa8] sm:$0xff]
        %v887 = vld [vmem:[#allocation3 + $0xb0] sm:$0xff]
        %v888 = vld [vmem:[#allocation3 + $0xb8] sm:$0xff]
        %s889 = scalar_lea.vmem [#allocation7], 768
        %v890 = vld [vmem:[%s889] sm:$0xff]
        %v891 = vld [vmem:[%s889 + $0x8] sm:$0xff]
        %v892 = vld [vmem:[%s889 + $0x10] sm:$0xff]
        %v893 = vld [vmem:[%s889 + $0x18] sm:$0xff]
        %v894 = vld [vmem:[%s889 + $0x20] sm:$0xff]
        %v895 = vld [vmem:[%s889 + $0x28] sm:$0xff]
        %v896 = vld [vmem:[%s889 + $0x30] sm:$0xff]
        %v897 = vld [vmem:[%s889 + $0x38] sm:$0xff]
        %v898 = vld [vmem:[%s889 + $0x40] sm:$0xff]
        %v899 = vld [vmem:[%s889 + $0x48] sm:$0xff]
        %v900 = vld [vmem:[%s889 + $0x50] sm:$0xff]
        %v901 = vld [vmem:[%s889 + $0x58] sm:$0xff]
        %v902 = vld [vmem:[%s889 + $0x60] sm:$0xff]
        %v903 = vld [vmem:[%s889 + $0x68] sm:$0xff]
        %v904 = vld [vmem:[%s889 + $0x70] sm:$0xff]
        %v905 = vld [vmem:[%s889 + $0x78] sm:$0xff]
        %v906 = vld [vmem:[%s889 + $0x80] sm:$0xff]
        %v907 = vld [vmem:[%s889 + $0x88] sm:$0xff]
        %v908 = vld [vmem:[%s889 + $0x90] sm:$0xff]
        %v909 = vld [vmem:[%s889 + $0x98] sm:$0xff]
        %v910 = vld [vmem:[%s889 + $0xa0] sm:$0xff]
        %v911 = vld [vmem:[%s889 + $0xa8] sm:$0xff]
        %v912 = vld [vmem:[%s889 + $0xb0] sm:$0xff]
        %v913 = vld [vmem:[%s889 + $0xb8] sm:$0xff]
        %v914 = vld [vmem:[%s889 + $0xc0] sm:$0xff]
        %v915 = vld [vmem:[%s889 + $0xc8] sm:$0xff]
        %v916 = vld [vmem:[%s889 + $0xd0] sm:$0xff]
        %v917 = vld [vmem:[%s889 + $0xd8] sm:$0xff]
        %v918 = vld [vmem:[%s889 + $0xe0] sm:$0xff]
        %v919 = vld [vmem:[%s889 + $0xe8] sm:$0xff]
        %v920 = vld [vmem:[%s889 + $0xf0] sm:$0xff]
        %v921 = vld [vmem:[%s889 + $0xf8] sm:$0xff]
        %v922 = vld [vmem:[%s889 + $0x100] sm:$0xff]
        %v923 = vld [vmem:[%s889 + $0x108] sm:$0xff]
        %v924 = vld [vmem:[%s889 + $0x110] sm:$0xff]
        %v925 = vld [vmem:[%s889 + $0x118] sm:$0xff]
        %v926 = vld [vmem:[%s889 + $0x120] sm:$0xff]
        %v927 = vld [vmem:[%s889 + $0x128] sm:$0xff]
        %v928 = vld [vmem:[%s889 + $0x130] sm:$0xff]
        %v929 = vld [vmem:[%s889 + $0x138] sm:$0xff]
        %v930 = vld [vmem:[%s889 + $0x140] sm:$0xff]
        %v931 = vld [vmem:[%s889 + $0x148] sm:$0xff]
        %v932 = vld [vmem:[%s889 + $0x150] sm:$0xff]
        %v933 = vld [vmem:[%s889 + $0x158] sm:$0xff]
        %v934 = vld [vmem:[%s889 + $0x160] sm:$0xff]
        %v935 = vld [vmem:[%s889 + $0x168] sm:$0xff]
        %v936 = vld [vmem:[%s889 + $0x170] sm:$0xff]
        %v937 = vld [vmem:[%s889 + $0x178] sm:$0xff]
        %s938 = scalar_lea.vmem [#allocation9], 2
        %v939 = vld [vmem:[%s938] sm:$0x1]
        %v941 = vperm.slane %v939, 0
        %943 = vmatpush.msra.mxu0 %v905
        %944 = vmatpush.msra.mxu0 %v904
        %945 = vmatpush.msra.mxu0 %v903
        %946 = vmatpush.msra.mxu0 %v902
        %947 = vmatpush.msra.mxu0 %v901
        %948 = vmatpush.msra.mxu0 %v900
        %949 = vmatpush.msra.mxu0 %v899
        %950 = vmatpush.msra.mxu0 %v898
        %951 = vmatpush.msra.mxu0 %v897
        %952 = vmatpush.msra.mxu0 %v896
        %953 = vmatpush.msra.mxu0 %v895
        %954 = vmatpush.msra.mxu0 %v894
        %955 = vmatpush.msra.mxu0 %v893
        %956 = vmatpush.msra.mxu0 %v892
        %957 = vmatpush.msra.mxu0 %v891
        %958 = vmatpush.msra.mxu0 %v890
        %959 = vmatmul.f32.gmra.mxu0 %v865
        %v960 = vpop.f32.mrf.mxu0
        %v961 = vadd.f32 %v941, %v960
        %962 = vmatmul.f32.gmra.mxu0 %v868
        %v963 = vpop.f32.mrf.mxu0
        %v964 = vadd.f32 %v941, %v963
        %965 = vmatmul.f32.gmra.mxu0 %v871
        %v966 = vpop.f32.mrf.mxu0
        %v967 = vadd.f32 %v941, %v966
        %968 = vmatmul.f32.gmra.mxu0 %v874
        %v969 = vpop.f32.mrf.mxu0
        %v970 = vadd.f32 %v941, %v969
        %971 = vmatmul.f32.gmra.mxu0 %v877
        %v972 = vpop.f32.mrf.mxu0
        %v973 = vadd.f32 %v941, %v972
        %974 = vmatmul.f32.gmra.mxu0 %v880
        %v975 = vpop.f32.mrf.mxu0
        %v976 = vadd.f32 %v941, %v975
        %977 = vmatmul.f32.gmra.mxu0 %v883
        %v978 = vpop.f32.mrf.mxu0
        %v979 = vadd.f32 %v941, %v978
        %980 = vmatmul.f32.gmra.mxu0 %v886
        %v981 = vpop.f32.mrf.mxu0
        %v982 = vadd.f32 %v941, %v981
        %983 = vdwg.mxu0
        %984 = vmatpush.msra.mxu0 %v921
        %985 = vmatpush.msra.mxu0 %v920
        %986 = vmatpush.msra.mxu0 %v919
        %987 = vmatpush.msra.mxu0 %v918
        %988 = vmatpush.msra.mxu0 %v917
        %989 = vmatpush.msra.mxu0 %v916
        %990 = vmatpush.msra.mxu0 %v915
        %991 = vmatpush.msra.mxu0 %v914
        %992 = vmatpush.msra.mxu0 %v913
        %993 = vmatpush.msra.mxu0 %v912
        %994 = vmatpush.msra.mxu0 %v911
        %995 = vmatpush.msra.mxu0 %v910
        %996 = vmatpush.msra.mxu0 %v909
        %997 = vmatpush.msra.mxu0 %v908
        %998 = vmatpush.msra.mxu0 %v907
        %999 = vmatpush.msra.mxu0 %v906
        %1000 = vmatmul.f32.gmra.mxu0 %v866
        %v1001 = vpop.f32.mrf.mxu0
        %v1002 = vadd.f32 %v961, %v1001
        %1003 = vmatmul.f32.gmra.mxu0 %v869
        %v1004 = vpop.f32.mrf.mxu0
        %v1005 = vadd.f32 %v964, %v1004
        %1006 = vmatmul.f32.gmra.mxu0 %v872
        %v1007 = vpop.f32.mrf.mxu0
        %v1008 = vadd.f32 %v967, %v1007
        %1009 = vmatmul.f32.gmra.mxu0 %v875
        %v1010 = vpop.f32.mrf.mxu0
        %v1011 = vadd.f32 %v970, %v1010
        %1012 = vmatmul.f32.gmra.mxu0 %v878
        %v1013 = vpop.f32.mrf.mxu0
        %v1014 = vadd.f32 %v973, %v1013
        %1015 = vmatmul.f32.gmra.mxu0 %v881
        %v1016 = vpop.f32.mrf.mxu0
        %v1017 = vadd.f32 %v976, %v1016
        %1018 = vmatmul.f32.gmra.mxu0 %v884
        %v1019 = vpop.f32.mrf.mxu0
        %v1020 = vadd.f32 %v979, %v1019
        %1021 = vmatmul.f32.gmra.mxu0 %v887
        %v1022 = vpop.f32.mrf.mxu0
        %v1023 = vadd.f32 %v982, %v1022
        %1024 = vdwg.mxu0
        %1025 = vmatpush.msra.mxu0 %v937
        %1026 = vmatpush.msra.mxu0 %v936
        %1027 = vmatpush.msra.mxu0 %v935
        %1028 = vmatpush.msra.mxu0 %v934
        %1029 = vmatpush.msra.mxu0 %v933
        %1030 = vmatpush.msra.mxu0 %v932
        %1031 = vmatpush.msra.mxu0 %v931
        %1032 = vmatpush.msra.mxu0 %v930
        %1033 = vmatpush.msra.mxu0 %v929
        %1034 = vmatpush.msra.mxu0 %v928
        %1035 = vmatpush.msra.mxu0 %v927
        %1036 = vmatpush.msra.mxu0 %v926
        %1037 = vmatpush.msra.mxu0 %v925
        %1038 = vmatpush.msra.mxu0 %v924
        %1039 = vmatpush.msra.mxu0 %v923
        %1040 = vmatpush.msra.mxu0 %v922
        %1041 = vmatmul.f32.gmra.mxu0 %v867
        %v1042 = vpop.f32.mrf.mxu0
        %v1043 = vadd.f32 %v1002, %v1042
        %1044 = vmatmul.f32.gmra.mxu0 %v870
        %v1045 = vpop.f32.mrf.mxu0
        %v1046 = vadd.f32 %v1005, %v1045
        %1047 = vmatmul.f32.gmra.mxu0 %v873
        %v1048 = vpop.f32.mrf.mxu0
        %v1049 = vadd.f32 %v1008, %v1048
        %1050 = vmatmul.f32.gmra.mxu0 %v876
        %v1051 = vpop.f32.mrf.mxu0
        %v1052 = vadd.f32 %v1011, %v1051
        %1053 = vmatmul.f32.gmra.mxu0 %v879
        %v1054 = vpop.f32.mrf.mxu0
        %v1055 = vadd.f32 %v1014, %v1054
        %1056 = vmatmul.f32.gmra.mxu0 %v882
        %v1057 = vpop.f32.mrf.mxu0
        %v1058 = vadd.f32 %v1017, %v1057
        %1059 = vmatmul.f32.gmra.mxu0 %v885
        %v1060 = vpop.f32.mrf.mxu0
        %v1061 = vadd.f32 %v1020, %v1060
        %1062 = vmatmul.f32.gmra.mxu0 %v888
        %v1063 = vpop.f32.mrf.mxu0
        %v1064 = vadd.f32 %v1023, %v1063
        %1065 = vdwg.mxu0
        %vm1066 = vcmp.ge.f32.partialorder %v1043, 0.0
        %vm1067 = vcmp.ge.f32.partialorder %v1046, 0.0
        %vm1068 = vcmp.ge.f32.partialorder %v1049, 0.0
        %vm1069 = vcmp.ge.f32.partialorder %v1052, 0.0
        %vm1070 = vcmp.ge.f32.partialorder %v1055, 0.0
        %vm1071 = vcmp.ge.f32.partialorder %v1058, 0.0
        %vm1072 = vcmp.ge.f32.partialorder %v1061, 0.0
        %vm1073 = vcmp.ge.f32.partialorder %v1064, 0.0
        %v1074 = vmul.f32 %v1043, 0.2
        %v1075 = vmul.f32 %v1046, 0.2
        %v1076 = vmul.f32 %v1049, 0.2
        %v1077 = vmul.f32 %v1052, 0.2
        %v1078 = vmul.f32 %v1055, 0.2
        %v1079 = vmul.f32 %v1058, 0.2
        %v1080 = vmul.f32 %v1061, 0.2
        %v1081 = vmul.f32 %v1064, 0.2
        %v1082 = vsel %vm1066, %v1043, %v1074
        %v1083 = vsel %vm1067, %v1046, %v1075
        %v1084 = vsel %vm1068, %v1049, %v1076
        %v1085 = vsel %vm1069, %v1052, %v1077
        %v1086 = vsel %vm1070, %v1055, %v1078
        %v1087 = vsel %vm1071, %v1058, %v1079
        %v1088 = vsel %vm1072, %v1061, %v1080
        %v1089 = vsel %vm1073, %v1064, %v1081
        %1090 = vst [vmem:[#allocation2 + $0x4] sm:$0xff] %v1082
        %1091 = vst [vmem:[#allocation2 + $0xc] sm:$0xff] %v1083
        %1092 = vst [vmem:[#allocation2 + $0x14] sm:$0xff] %v1084
        %1093 = vst [vmem:[#allocation2 + $0x1c] sm:$0xff] %v1085
        %1094 = vst [vmem:[#allocation2 + $0x24] sm:$0xff] %v1086
        %1095 = vst [vmem:[#allocation2 + $0x2c] sm:$0xff] %v1087
        %1096 = vst [vmem:[#allocation2 + $0x34] sm:$0xff] %v1088
        %1097 = vst [vmem:[#allocation2 + $0x3c] sm:$0xff] %v1089
        %v1098 = vld [vmem:[#allocation2] sm:$0xff]
        %v1099 = vld [vmem:[#allocation2 + $0x8] sm:$0xff]
        %v1100 = vld [vmem:[#allocation2 + $0x10] sm:$0xff]
        %v1101 = vld [vmem:[#allocation2 + $0x18] sm:$0xff]
        %v1102 = vld [vmem:[#allocation2 + $0x20] sm:$0xff]
        %v1103 = vld [vmem:[#allocation2 + $0x28] sm:$0xff]
        %v1104 = vld [vmem:[#allocation2 + $0x30] sm:$0xff]
        %v1105 = vld [vmem:[#allocation2 + $0x38] sm:$0xff]
        %1106 = vst [vmem:[#allocation3] sm:$0xff] %v1098
        %1107 = vst [vmem:[#allocation3 + $0x18] sm:$0xff] %v1099
        %1108 = vst [vmem:[#allocation3 + $0x30] sm:$0xff] %v1100
        %1109 = vst [vmem:[#allocation3 + $0x48] sm:$0xff] %v1101
        %1110 = vst [vmem:[#allocation3 + $0x60] sm:$0xff] %v1102
        %1111 = vst [vmem:[#allocation3 + $0x78] sm:$0xff] %v1103
        %1112 = vst [vmem:[#allocation3 + $0x90] sm:$0xff] %v1104
        %1113 = vst [vmem:[#allocation3 + $0xa8] sm:$0xff] %v1105
        %v1114 = vld [vmem:[#allocation2 + $0x4] sm:$0xff]
        %v1115 = vld [vmem:[#allocation2 + $0xc] sm:$0xff]
        %v1116 = vld [vmem:[#allocation2 + $0x14] sm:$0xff]
        %v1117 = vld [vmem:[#allocation2 + $0x1c] sm:$0xff]
        %v1118 = vld [vmem:[#allocation2 + $0x24] sm:$0xff]
        %v1119 = vld [vmem:[#allocation2 + $0x2c] sm:$0xff]
        %v1120 = vld [vmem:[#allocation2 + $0x34] sm:$0xff]
        %v1121 = vld [vmem:[#allocation2 + $0x3c] sm:$0xff]
        %1122 = vst [vmem:[#allocation3 + $0x8] sm:$0xff] %v1114
        %1123 = vst [vmem:[#allocation3 + $0x20] sm:$0xff] %v1115
        %1124 = vst [vmem:[#allocation3 + $0x38] sm:$0xff] %v1116
        %1125 = vst [vmem:[#allocation3 + $0x50] sm:$0xff] %v1117
        %1126 = vst [vmem:[#allocation3 + $0x68] sm:$0xff] %v1118
        %1127 = vst [vmem:[#allocation3 + $0x80] sm:$0xff] %v1119
        %1128 = vst [vmem:[#allocation3 + $0x98] sm:$0xff] %v1120
        %1129 = vst [vmem:[#allocation3 + $0xb0] sm:$0xff] %v1121
        %v1130 = vld [vmem:[#allocation2 + $0x8] sm:$0xff]
        %v1131 = vld [vmem:[#allocation2 + $0x10] sm:$0xff]
        %v1132 = vld [vmem:[#allocation2 + $0x18] sm:$0xff]
        %v1133 = vld [vmem:[#allocation2 + $0x20] sm:$0xff]
        %v1134 = vld [vmem:[#allocation2 + $0x28] sm:$0xff]
        %v1135 = vld [vmem:[#allocation2 + $0x30] sm:$0xff]
        %v1136 = vld [vmem:[#allocation2 + $0x38] sm:$0xff]
        %v1137 = vld [vmem:[#allocation2 + $0x40] sm:$0xff]
        %1138 = vst [vmem:[#allocation3 + $0x10] sm:$0xff] %v1130
        %1139 = vst [vmem:[#allocation3 + $0x28] sm:$0xff] %v1131
        %1140 = vst [vmem:[#allocation3 + $0x40] sm:$0xff] %v1132
        %1141 = vst [vmem:[#allocation3 + $0x58] sm:$0xff] %v1133
        %1142 = vst [vmem:[#allocation3 + $0x70] sm:$0xff] %v1134
        %1143 = vst [vmem:[#allocation3 + $0x88] sm:$0xff] %v1135
        %1144 = vst [vmem:[#allocation3 + $0xa0] sm:$0xff] %v1136
        %1145 = vst [vmem:[#allocation3 + $0xb8] sm:$0xff] %v1137
        %v1146 = vld [vmem:[#allocation3] sm:$0xff]
        %v1147 = vld [vmem:[#allocation3 + $0x8] sm:$0xff]
        %v1148 = vld [vmem:[#allocation3 + $0x10] sm:$0xff]
        %v1149 = vld [vmem:[#allocation3 + $0x18] sm:$0xff]
        %v1150 = vld [vmem:[#allocation3 + $0x20] sm:$0xff]
        %v1151 = vld [vmem:[#allocation3 + $0x28] sm:$0xff]
        %v1152 = vld [vmem:[#allocation3 + $0x30] sm:$0xff]
        %v1153 = vld [vmem:[#allocation3 + $0x38] sm:$0xff]
        %v1154 = vld [vmem:[#allocation3 + $0x40] sm:$0xff]
        %v1155 = vld [vmem:[#allocation3 + $0x48] sm:$0xff]
        %v1156 = vld [vmem:[#allocation3 + $0x50] sm:$0xff]
        %v1157 = vld [vmem:[#allocation3 + $0x58] sm:$0xff]
        %v1158 = vld [vmem:[#allocation3 + $0x60] sm:$0xff]
        %v1159 = vld [vmem:[#allocation3 + $0x68] sm:$0xff]
        %v1160 = vld [vmem:[#allocation3 + $0x70] sm:$0xff]
        %v1161 = vld [vmem:[#allocation3 + $0x78] sm:$0xff]
        %v1162 = vld [vmem:[#allocation3 + $0x80] sm:$0xff]
        %v1163 = vld [vmem:[#allocation3 + $0x88] sm:$0xff]
        %v1164 = vld [vmem:[#allocation3 + $0x90] sm:$0xff]
        %v1165 = vld [vmem:[#allocation3 + $0x98] sm:$0xff]
        %v1166 = vld [vmem:[#allocation3 + $0xa0] sm:$0xff]
        %v1167 = vld [vmem:[#allocation3 + $0xa8] sm:$0xff]
        %v1168 = vld [vmem:[#allocation3 + $0xb0] sm:$0xff]
        %v1169 = vld [vmem:[#allocation3 + $0xb8] sm:$0xff]
        %s1170 = scalar_lea.vmem [#allocation7], 1152
        %v1171 = vld [vmem:[%s1170] sm:$0xff]
        %v1172 = vld [vmem:[%s1170 + $0x8] sm:$0xff]
        %v1173 = vld [vmem:[%s1170 + $0x10] sm:$0xff]
        %v1174 = vld [vmem:[%s1170 + $0x18] sm:$0xff]
        %v1175 = vld [vmem:[%s1170 + $0x20] sm:$0xff]
        %v1176 = vld [vmem:[%s1170 + $0x28] sm:$0xff]
        %v1177 = vld [vmem:[%s1170 + $0x30] sm:$0xff]
        %v1178 = vld [vmem:[%s1170 + $0x38] sm:$0xff]
        %v1179 = vld [vmem:[%s1170 + $0x40] sm:$0xff]
        %v1180 = vld [vmem:[%s1170 + $0x48] sm:$0xff]
        %v1181 = vld [vmem:[%s1170 + $0x50] sm:$0xff]
        %v1182 = vld [vmem:[%s1170 + $0x58] sm:$0xff]
        %v1183 = vld [vmem:[%s1170 + $0x60] sm:$0xff]
        %v1184 = vld [vmem:[%s1170 + $0x68] sm:$0xff]
        %v1185 = vld [vmem:[%s1170 + $0x70] sm:$0xff]
        %v1186 = vld [vmem:[%s1170 + $0x78] sm:$0xff]
        %v1187 = vld [vmem:[%s1170 + $0x80] sm:$0xff]
        %v1188 = vld [vmem:[%s1170 + $0x88] sm:$0xff]
        %v1189 = vld [vmem:[%s1170 + $0x90] sm:$0xff]
        %v1190 = vld [vmem:[%s1170 + $0x98] sm:$0xff]
        %v1191 = vld [vmem:[%s1170 + $0xa0] sm:$0xff]
        %v1192 = vld [vmem:[%s1170 + $0xa8] sm:$0xff]
        %v1193 = vld [vmem:[%s1170 + $0xb0] sm:$0xff]
        %v1194 = vld [vmem:[%s1170 + $0xb8] sm:$0xff]
        %v1195 = vld [vmem:[%s1170 + $0xc0] sm:$0xff]
        %v1196 = vld [vmem:[%s1170 + $0xc8] sm:$0xff]
        %v1197 = vld [vmem:[%s1170 + $0xd0] sm:$0xff]
        %v1198 = vld [vmem:[%s1170 + $0xd8] sm:$0xff]
        %v1199 = vld [vmem:[%s1170 + $0xe0] sm:$0xff]
        %v1200 = vld [vmem:[%s1170 + $0xe8] sm:$0xff]
        %v1201 = vld [vmem:[%s1170 + $0xf0] sm:$0xff]
        %v1202 = vld [vmem:[%s1170 + $0xf8] sm:$0xff]
        %v1203 = vld [vmem:[%s1170 + $0x100] sm:$0xff]
        %v1204 = vld [vmem:[%s1170 + $0x108] sm:$0xff]
        %v1205 = vld [vmem:[%s1170 + $0x110] sm:$0xff]
        %v1206 = vld [vmem:[%s1170 + $0x118] sm:$0xff]
        %v1207 = vld [vmem:[%s1170 + $0x120] sm:$0xff]
        %v1208 = vld [vmem:[%s1170 + $0x128] sm:$0xff]
        %v1209 = vld [vmem:[%s1170 + $0x130] sm:$0xff]
        %v1210 = vld [vmem:[%s1170 + $0x138] sm:$0xff]
        %v1211 = vld [vmem:[%s1170 + $0x140] sm:$0xff]
        %v1212 = vld [vmem:[%s1170 + $0x148] sm:$0xff]
        %v1213 = vld [vmem:[%s1170 + $0x150] sm:$0xff]
        %v1214 = vld [vmem:[%s1170 + $0x158] sm:$0xff]
        %v1215 = vld [vmem:[%s1170 + $0x160] sm:$0xff]
        %v1216 = vld [vmem:[%s1170 + $0x168] sm:$0xff]
        %v1217 = vld [vmem:[%s1170 + $0x170] sm:$0xff]
        %v1218 = vld [vmem:[%s1170 + $0x178] sm:$0xff]
        %s1219 = scalar_lea.vmem [#allocation9], 3
        %v1220 = vld [vmem:[%s1219] sm:$0x1]
        %v1222 = vperm.slane %v1220, 0
        %1224 = vmatpush.msra.mxu0 %v1186
        %1225 = vmatpush.msra.mxu0 %v1185
        %1226 = vmatpush.msra.mxu0 %v1184
        %1227 = vmatpush.msra.mxu0 %v1183
        %1228 = vmatpush.msra.mxu0 %v1182
        %1229 = vmatpush.msra.mxu0 %v1181
        %1230 = vmatpush.msra.mxu0 %v1180
        %1231 = vmatpush.msra.mxu0 %v1179
        %1232 = vmatpush.msra.mxu0 %v1178
        %1233 = vmatpush.msra.mxu0 %v1177
        %1234 = vmatpush.msra.mxu0 %v1176
        %1235 = vmatpush.msra.mxu0 %v1175
        %1236 = vmatpush.msra.mxu0 %v1174
        %1237 = vmatpush.msra.mxu0 %v1173
        %1238 = vmatpush.msra.mxu0 %v1172
        %1239 = vmatpush.msra.mxu0 %v1171
        %1240 = vmatmul.f32.gmra.mxu0 %v1146
        %v1241 = vpop.f32.mrf.mxu0
        %v1242 = vadd.f32 %v1222, %v1241
        %1243 = vmatmul.f32.gmra.mxu0 %v1149
        %v1244 = vpop.f32.mrf.mxu0
        %v1245 = vadd.f32 %v1222, %v1244
        %1246 = vmatmul.f32.gmra.mxu0 %v1152
        %v1247 = vpop.f32.mrf.mxu0
        %v1248 = vadd.f32 %v1222, %v1247
        %1249 = vmatmul.f32.gmra.mxu0 %v1155
        %v1250 = vpop.f32.mrf.mxu0
        %v1251 = vadd.f32 %v1222, %v1250
        %1252 = vmatmul.f32.gmra.mxu0 %v1158
        %v1253 = vpop.f32.mrf.mxu0
        %v1254 = vadd.f32 %v1222, %v1253
        %1255 = vmatmul.f32.gmra.mxu0 %v1161
        %v1256 = vpop.f32.mrf.mxu0
        %v1257 = vadd.f32 %v1222, %v1256
        %1258 = vmatmul.f32.gmra.mxu0 %v1164
        %v1259 = vpop.f32.mrf.mxu0
        %v1260 = vadd.f32 %v1222, %v1259
        %1261 = vmatmul.f32.gmra.mxu0 %v1167
        %v1262 = vpop.f32.mrf.mxu0
        %v1263 = vadd.f32 %v1222, %v1262
        %1264 = vdwg.mxu0
        %1265 = vmatpush.msra.mxu0 %v1202
        %1266 = vmatpush.msra.mxu0 %v1201
        %1267 = vmatpush.msra.mxu0 %v1200
        %1268 = vmatpush.msra.mxu0 %v1199
        %1269 = vmatpush.msra.mxu0 %v1198
        %1270 = vmatpush.msra.mxu0 %v1197
        %1271 = vmatpush.msra.mxu0 %v1196
        %1272 = vmatpush.msra.mxu0 %v1195
        %1273 = vmatpush.msra.mxu0 %v1194
        %1274 = vmatpush.msra.mxu0 %v1193
        %1275 = vmatpush.msra.mxu0 %v1192
        %1276 = vmatpush.msra.mxu0 %v1191
        %1277 = vmatpush.msra.mxu0 %v1190
        %1278 = vmatpush.msra.mxu0 %v1189
        %1279 = vmatpush.msra.mxu0 %v1188
        %1280 = vmatpush.msra.mxu0 %v1187
        %1281 = vmatmul.f32.gmra.mxu0 %v1147
        %v1282 = vpop.f32.mrf.mxu0
        %v1283 = vadd.f32 %v1242, %v1282
        %1284 = vmatmul.f32.gmra.mxu0 %v1150
        %v1285 = vpop.f32.mrf.mxu0
        %v1286 = vadd.f32 %v1245, %v1285
        %1287 = vmatmul.f32.gmra.mxu0 %v1153
        %v1288 = vpop.f32.mrf.mxu0
        %v1289 = vadd.f32 %v1248, %v1288
        %1290 = vmatmul.f32.gmra.mxu0 %v1156
        %v1291 = vpop.f32.mrf.mxu0
        %v1292 = vadd.f32 %v1251, %v1291
        %1293 = vmatmul.f32.gmra.mxu0 %v1159
        %v1294 = vpop.f32.mrf.mxu0
        %v1295 = vadd.f32 %v1254, %v1294
        %1296 = vmatmul.f32.gmra.mxu0 %v1162
        %v1297 = vpop.f32.mrf.mxu0
        %v1298 = vadd.f32 %v1257, %v1297
        %1299 = vmatmul.f32.gmra.mxu0 %v1165
        %v1300 = vpop.f32.mrf.mxu0
        %v1301 = vadd.f32 %v1260, %v1300
        %1302 = vmatmul.f32.gmra.mxu0 %v1168
        %v1303 = vpop.f32.mrf.mxu0
        %v1304 = vadd.f32 %v1263, %v1303
        %1305 = vdwg.mxu0
        %1306 = vmatpush.msra.mxu0 %v1218
        %1307 = vmatpush.msra.mxu0 %v1217
        %1308 = vmatpush.msra.mxu0 %v1216
        %1309 = vmatpush.msra.mxu0 %v1215
        %1310 = vmatpush.msra.mxu0 %v1214
        %1311 = vmatpush.msra.mxu0 %v1213
        %1312 = vmatpush.msra.mxu0 %v1212
        %1313 = vmatpush.msra.mxu0 %v1211
        %1314 = vmatpush.msra.mxu0 %v1210
        %1315 = vmatpush.msra.mxu0 %v1209
        %1316 = vmatpush.msra.mxu0 %v1208
        %1317 = vmatpush.msra.mxu0 %v1207
        %1318 = vmatpush.msra.mxu0 %v1206
        %1319 = vmatpush.msra.mxu0 %v1205
        %1320 = vmatpush.msra.mxu0 %v1204
        %1321 = vmatpush.msra.mxu0 %v1203
        %1322 = vmatmul.f32.gmra.mxu0 %v1148
        %v1323 = vpop.f32.mrf.mxu0
        %v1324 = vadd.f32 %v1283, %v1323
        %1325 = vmatmul.f32.gmra.mxu0 %v1151
        %v1326 = vpop.f32.mrf.mxu0
        %v1327 = vadd.f32 %v1286, %v1326
        %1328 = vmatmul.f32.gmra.mxu0 %v1154
        %v1329 = vpop.f32.mrf.mxu0
        %v1330 = vadd.f32 %v1289, %v1329
        %1331 = vmatmul.f32.gmra.mxu0 %v1157
        %v1332 = vpop.f32.mrf.mxu0
        %v1333 = vadd.f32 %v1292, %v1332
        %1334 = vmatmul.f32.gmra.mxu0 %v1160
        %v1335 = vpop.f32.mrf.mxu0
        %v1336 = vadd.f32 %v1295, %v1335
        %1337 = vmatmul.f32.gmra.mxu0 %v1163
        %v1338 = vpop.f32.mrf.mxu0
        %v1339 = vadd.f32 %v1298, %v1338
        %1340 = vmatmul.f32.gmra.mxu0 %v1166
        %v1341 = vpop.f32.mrf.mxu0
        %v1342 = vadd.f32 %v1301, %v1341
        %1343 = vmatmul.f32.gmra.mxu0 %v1169
        %v1344 = vpop.f32.mrf.mxu0
        %v1345 = vadd.f32 %v1304, %v1344
        %1346 = vdwg.mxu0
        %vm1347 = vcmp.ge.f32.partialorder %v1324, 0.0
        %vm1348 = vcmp.ge.f32.partialorder %v1327, 0.0
        %vm1349 = vcmp.ge.f32.partialorder %v1330, 0.0
        %vm1350 = vcmp.ge.f32.partialorder %v1333, 0.0
        %vm1351 = vcmp.ge.f32.partialorder %v1336, 0.0
        %vm1352 = vcmp.ge.f32.partialorder %v1339, 0.0
        %vm1353 = vcmp.ge.f32.partialorder %v1342, 0.0
        %vm1354 = vcmp.ge.f32.partialorder %v1345, 0.0
        %v1355 = vmul.f32 %v1324, 0.2
        %v1356 = vmul.f32 %v1327, 0.2
        %v1357 = vmul.f32 %v1330, 0.2
        %v1358 = vmul.f32 %v1333, 0.2
        %v1359 = vmul.f32 %v1336, 0.2
        %v1360 = vmul.f32 %v1339, 0.2
        %v1361 = vmul.f32 %v1342, 0.2
        %v1362 = vmul.f32 %v1345, 0.2
        %v1363 = vsel %vm1347, %v1324, %v1355
        %v1364 = vsel %vm1348, %v1327, %v1356
        %v1365 = vsel %vm1349, %v1330, %v1357
        %v1366 = vsel %vm1350, %v1333, %v1358
        %v1367 = vsel %vm1351, %v1336, %v1359
        %v1368 = vsel %vm1352, %v1339, %v1360
        %v1369 = vsel %vm1353, %v1342, %v1361
        %v1370 = vsel %vm1354, %v1345, %v1362
        %v1371 = vadd.f32 %v1363, %v801
        %v1372 = vadd.f32 %v1364, %v802
        %v1373 = vadd.f32 %v1365, %v803
        %v1374 = vadd.f32 %v1366, %v804
        %v1375 = vadd.f32 %v1367, %v805
        %v1376 = vadd.f32 %v1368, %v806
        %v1377 = vadd.f32 %v1369, %v807
        %v1378 = vadd.f32 %v1370, %v808
        %1379 = vst [vmem:[%s223] sm:$0xff] %v1371
        %1380 = vst [vmem:[%s223 + $0x8] sm:$0xff] %v1372
        %1381 = vst [vmem:[%s223 + $0x10] sm:$0xff] %v1373
        %1382 = vst [vmem:[%s223 + $0x18] sm:$0xff] %v1374
        %1383 = vst [vmem:[%s223 + $0x20] sm:$0xff] %v1375
        %1384 = vst [vmem:[%s223 + $0x28] sm:$0xff] %v1376
        %1385 = vst [vmem:[%s223 + $0x30] sm:$0xff] %v1377
        %1386 = vst [vmem:[%s223 + $0x38] sm:$0xff] %v1378
        %s1387 = sand.u32 %s97, 1
        %s1388 = scalar_lea.sflag [#allocation6], %s1387
        %s1389 = sand.u32 %s97, 1
        %s1390 = smul.addr %s1389, 64
        %s1391 = scalar_lea.vmem [#allocation10], %s1390
        // Predicated region
        $region45: #{tpu_custom_call.1} parent=31 // pred_check
          %p1392 = pneg %p107
        $region46: #{tpu_custom_call.1} parent=31 // pred_check_branch
          %1394 = sbr.rel (%p1392) target = $region48
        $region47: #{tpu_custom_call.1} parent=31 // pred_region
          %1396 = vsyncadd %s1388, 0
          %s1397 = smul.addr %s21, 8
          %s1398 = smul.addr %s1397, 8
          %s1399 = scalar_lea.hbm %s3, %s1398
          %s1400 = sshll.u32 %s1391, 4
          %s1401 = int_to_ptr.vmem [resolvable:$true] %s1400
          %s1402 = sshll.u32 %s1399, 4
          %s1403 = int_to_ptr.hbm [resolvable:$true] %s1402
          %1408 = dma.vmem_to_hbm [thread:$0]  %s1401, 1024, %s1403, %s1388, 128, 128, 8
        $region48: #{tpu_custom_call.1} parent=31 // pred_fallthru
          _
      $region32: #{tpu_custom_call.1} parent=5 // pred_fallthru
        _
      %p1409 = scmp.le.s32.totalorder 2, %s16
      // Predicated region
      $region49: #{tpu_custom_call.1} parent=5 // pred_check
        %p1410 = pneg %p1409
      $region50: #{tpu_custom_call.1} parent=5 // pred_check_branch
        %1412 = sbr.rel (%p1410) target = $region52
      $region51: #{tpu_custom_call.1} parent=5 // pred_region
        %s1413 = ssub.s32 %s16, 2
        // Predicated region
        $region53: #{tpu_custom_call.1} parent=51 // pred_check
          %p1414 = pneg %p113
        $region54: #{tpu_custom_call.1} parent=51 // pred_check_branch
          %1416 = sbr.rel (%p1414) target = $region56
        $region55: #{tpu_custom_call.1} parent=51 // pred_region
          %s1417 = sand.u32 %s98, 1
          %s1418 = scalar_lea.sflag [#allocation6], %s1417
          %s1419 = sand.u32 %s98, 1
          %s1420 = smul.addr %s1419, 64
          %s1421 = scalar_lea.vmem [#allocation10], %s1420
          %1423 = dma.done %s1418, 1024
        $region56: #{tpu_custom_call.1} parent=51 // pred_fallthru
          _
      $region52: #{tpu_custom_call.1} parent=5 // pred_fallthru
        _
    $region6: #{tpu_custom_call.1} parent=1 // loop_footer
      %s20 = sadd.s32 1, %s16
    $region7: #{tpu_custom_call.1} parent=1 // loop_footer_branch
      %15 = sbr.rel target = $region3
    $region8: #{tpu_custom_call.1} parent=1 // loop_exit
      _
    %1424 = vsyncpa [#allocation5], 1
    %s1425 = scalar_lea.sflag [#allocation5], 1
    %1426 = vsyncpa %s1425, 1
    %1427 = vsyncpa [#allocation8], 1
    %1428 = vsyncpa [#allocation6], 1
    %s1429 = scalar_lea.sflag [#allocation6], 1
    %1430 = vsyncpa %s1429, 1

</llo_original>
